<compile_context>
chip_gen: v6e
topology: v6e:2x2x1
jax: 0.10.0
libtpu: 0.0.40
codegen_flags: <defaults>
</compile_context>

<pallas_src>
from functools import partial

import jax
import jax.numpy as jnp
from jax import lax
from jax.experimental import pallas as pl
from jax.experimental.pallas import tpu as pltpu


def _ceil_to(x, m):
    return ((x + m - 1) // m) * m


# ----------------------------------------------------------------------------
# Fused kernel: QKV projection + multi-head attention + merge conv
# grid = (batch, query_tile); K/V projection cached in scratch per batch elem.
# ----------------------------------------------------------------------------
def mha_fused_kernel(xq_ref, xk_ref, xv_ref,
                     wq_ref, wk_ref, wv_ref, wm_ref,
                     bq_ref, bk_ref, bv_ref, bm_ref,
                     o_ref,
                     k_scr, v_scr, att_scr,
                     *, num_heads, head_dim, n_valid):
    f32 = jnp.float32
    bf16 = jnp.bfloat16

    # ---- K/V projections: once per batch element, cached across q tiles ----
    @pl.when(pl.program_id(1) == 0)
    def _():
        xk = xk_ref[0].astype(bf16)                                  # (C, Nk)
        xv = xv_ref[0].astype(bf16)                                  # (C, Nk)
        k_scr[...] = (jnp.dot(wk_ref[...], xk, preferred_element_type=f32)
                      + bk_ref[...]).astype(bf16)                    # (H*D, Nk)
        v_scr[...] = (jnp.dot(wv_ref[...], xv, preferred_element_type=f32)
                      + bv_ref[...]).astype(bf16)                    # (H*D, Nk)

    # ---- Q projection for this query tile (column layout, no transpose) ----
    xq = xq_ref[0].astype(bf16)                                      # (C, Tq)
    q_all = (jnp.dot(wq_ref[...], xq, preferred_element_type=f32)
             + bq_ref[...]).astype(bf16)                             # (H*D, Tq)
    k_all = k_scr[...]                                               # (H*D, Nk) bf16
    v_all = v_scr[...]                                               # (H*D, Nk) bf16

    # ---- padded-key mask bias (hoisted out of the head loop) ---------------
    nk = k_all.shape[-1]
    if nk > n_valid:
        col = lax.broadcasted_iota(jnp.int32, (1, nk), 1)
        kbias = jnp.where(col < n_valid, 0.0, -1e30).astype(f32)     # (1, Nk)
    else:
        kbias = None

    # ---- per-head attention, results written into the VMEM scratch slab ----
    # (static unroll is fine for small H; switch to lax.fori_loop(unroll=True)
    #  if num_heads grows beyond ~8)
    for h in range(num_heads):
        lo = h * head_dim
        hi = lo + head_dim
        q_h = q_all[lo:hi, :]                                        # (D, Tq)
        k_h = k_all[lo:hi, :]                                        # (D, Nk)
        v_h = v_all[lo:hi, :]                                        # (D, Nk)

        # scores[n, m] = sum_d q_h[d, n] * k_h[d, m]   (A^T B, no transpose)
        scores = lax.dot_general(q_h, k_h, (((0,), (0,)), ((), ())),
                                 preferred_element_type=f32)         # (Tq, Nk)
        if kbias is not None:
            scores = scores + kbias

        m = jnp.max(scores, axis=-1, keepdims=True)
        e = jnp.exp(scores - m)
        s = jnp.sum(e, axis=-1, keepdims=True)
        p = (e * pl.reciprocal(s, approx=True)).astype(bf16)         # (Tq, Nk)

        # out_h[d, n] = sum_m v_h[d, m] * p[n, m]   (A B^T, no transpose)
        out_h = lax.dot_general(v_h, p, (((1,), (1,)), ((), ())),
                                preferred_element_type=f32)          # (D, Tq)
        att_scr[lo:hi, :] = out_h

    # ---- fused merge 1x1 conv (single full-C contraction) ------------------
    att = att_scr[...].astype(bf16)                                  # (H*D, Tq)
    y = jnp.dot(wm_ref[...], att, preferred_element_type=f32) + bm_ref[...]
    o_ref[0] = y.astype(o_ref.dtype)


# ----------------------------------------------------------------------------
# One-time parameter preparation (hoisted out of the per-forward path):
#   * regroup Conv1d channels head-major (j = h*D + d) so per-head slices are
#     contiguous sublane ranges inside the kernel,
#   * fold 1/sqrt(head_dim) into the Q projection (in f32, then cast),
#   * cast weight slabs to bf16 for the MXU; biases stay f32.
# ----------------------------------------------------------------------------
def prepare_mha_params(params, num_heads, d_model, mxu_dtype=jnp.bfloat16):
    C = d_model
    H = num_heads
    D = C // H
    scale = 1.0 / (D ** 0.5)
    f32 = jnp.float32

    def regroup_w(w):   # (C_out, C_in), out channel c = d*H + h -> row j = h*D + d
        return w.astype(f32).reshape(D, H, C).transpose(1, 0, 2).reshape(H * D, C)

    def regroup_b(b):
        return b.astype(f32).reshape(D, H).transpose(1, 0).reshape(H * D, 1)

    return dict(
        wq=(regroup_w(params["wq"]) * scale).astype(mxu_dtype),
        bq=regroup_b(params["bq"]) * scale,
        wk=regroup_w(params["wk"]).astype(mxu_dtype),
        bk=regroup_b(params["bk"]),
        wv=regroup_w(params["wv"]).astype(mxu_dtype),
        bv=regroup_b(params["bv"]),
        # merge conv consumes head-major columns (j = h*D + d)
        wm=params["wm"].astype(f32).reshape(C, D, H).transpose(0, 2, 1)
                                    .reshape(C, H * D).astype(mxu_dtype),
        bm=params["bm"].astype(f32).reshape(C, 1),
    )


# ----------------------------------------------------------------------------
# Wrapper: lane-dense padding, query tiling, single pallas_call
# ----------------------------------------------------------------------------
def multi_headed_attention(query, key, value, prepared, num_heads, *, q_tile=256):
    """query/key/value: (B, d_model, N) -> (B, d_model, N)."""
    B, C, N = query.shape
    H = num_heads
    D = C // H
    assert H * D == C
    dt = query.dtype
    LANE = 128

    # Lane-dense sequence padding + query-tile size (128/256-multiples).
    n_pad = _ceil_to(N, LANE)
    if n_pad <= q_tile:
        tq = n_pad
    else:
        tq = q_tile
        n_pad = _ceil_to(N, tq)
    nq_tiles = n_pad // tq

    if n_pad != N:
        pad = ((0, 0), (0, 0), (0, n_pad - N))
        qp = jnp.pad(query, pad)
        kp = jnp.pad(key, pad)
        vp = jnp.pad(value, pad)
    else:
        qp, kp, vp = query, key, value

    q_spec = pl.BlockSpec((1, C, tq), lambda b, i: (b, 0, i))
    kv_spec = pl.BlockSpec((1, C, n_pad), lambda b, i: (b, 0, 0))
    o_spec = pl.BlockSpec((1, C, tq), lambda b, i: (b, 0, i))

    def const_spec(shape):
        return pl.BlockSpec(shape, lambda b, i: (0, 0))

    # VMEM budget: double-buffered input/output tiles + weight slabs + K/V/att
    # scratch + f32 working set (q_all/scores/probs), with 2x headroom,
    # clamped to [32 MiB, 48 MiB] (v7x has only 64 MiB physical VMEM).
    isz = jnp.dtype(dt).itemsize
    est = 0
    est += 2 * 2 * (C * tq * isz)                  # q tile + out tile, double-buffered
    est += 2 * 2 * (C * n_pad * isz)               # k, v blocks, double-buffered
    est += 4 * C * C * 2 + 4 * C * 4               # bf16 weight slabs + f32 biases
    est += 2 * (2 * C * n_pad)                     # k/v bf16 scratch
    est += 4 * (C * tq)                            # att f32 scratch
    est += 4 * (C * tq + 2 * tq * n_pad)           # q_all + scores + probs (f32-ish)
    vmem_limit = int(min(48 * 2 ** 20, max(32 * 2 ** 20, 2 * est)))

    out = pl.pallas_call(
        partial(mha_fused_kernel, num_heads=H, head_dim=D, n_valid=N),
        out_shape=jax.ShapeDtypeStruct((B, C, n_pad), dt),
        grid_spec=pltpu.PrefetchScalarGridSpec(
            num_scalar_prefetch=0,
            grid=(B, nq_tiles),
            in_specs=[
                q_spec, kv_spec, kv_spec,            # query / key / value
                const_spec((C, C)),                  # wq (bf16, VMEM-resident)
                const_spec((C, C)),                  # wk
                const_spec((C, C)),                  # wv
                const_spec((C, C)),                  # wm
                const_spec((C, 1)),                  # bq (f32)
                const_spec((C, 1)),                  # bk
                const_spec((C, 1)),                  # bv
                const_spec((C, 1)),                  # bm
            ],
            out_specs=o_spec,
            scratch_shapes=[
                pltpu.VMEM((C, n_pad), jnp.bfloat16),    # K projection cache
                pltpu.VMEM((C, n_pad), jnp.bfloat16),    # V projection cache
                pltpu.VMEM((C, tq), jnp.float32),        # merged head outputs
            ],
        ),
        compiler_params=pltpu.CompilerParams(
            # q-tile axis is "arbitrary": K/V projection cache is filled at
            # tile 0 and reused sequentially within each batch element.
            dimension_semantics=("parallel", "arbitrary"),
            vmem_limit_bytes=vmem_limit,
        ),
    )(qp, kp, vp,
      prepared["wq"], prepared["wk"], prepared["wv"], prepared["wm"],
      prepared["bq"], prepared["bk"], prepared["bv"], prepared["bm"])

    if n_pad != N:
        out = out[:, :, :N]
    return out


# ----------------------------------------------------------------------------
# Pure-JAX reference (mirrors the PyTorch module, f32 throughout)
# ----------------------------------------------------------------------------
def reference_forward(query, key, value, params, num_heads):
    B, C, N = query.shape
    dim = C // num_heads

    def c1(x, w, b):
        return jnp.einsum("oc,bcn->bon", w, x) + b[None, :, None]

    q = c1(query, params["wq"], params["bq"]).reshape(B, dim, num_heads, N)
    k = c1(key, params["wk"], params["bk"]).reshape(B, dim, num_heads, N)
    v = c1(value, params["wv"], params["bv"]).reshape(B, dim, num_heads, N)
    scores = jnp.einsum("bdhn,bdhm->bhnm", q, k) / (dim ** 0.5)
    prob = jax.nn.softmax(scores, axis=-1)
    x = jnp.einsum("bhnm,bdhm->bdhn", prob, v)
    return c1(x.reshape(B, dim * num_heads, N), params["wm"], params["bm"])


if __name__ == "__main__":
    B, d_model, num_heads, N = 2, 32, 4, 16

    key0 = jax.random.PRNGKey(0)
    keys = jax.random.split(key0, 12)

    # Conv1d(d_model, d_model, kernel_size=1) weights: (out, in) after squeezing k=1.
    scale = 1.0 / (d_model ** 0.5)
    params = {
        "wq": jax.random.normal(keys[0], (d_model, d_model), jnp.float32) * scale,
        "bq": jax.random.normal(keys[1], (d_model,), jnp.float32) * scale,
        "wk": jax.random.normal(keys[2], (d_model, d_model), jnp.float32) * scale,
        "bk": jax.random.normal(keys[3], (d_model,), jnp.float32) * scale,
        "wv": jax.random.normal(keys[4], (d_model, d_model), jnp.float32) * scale,
        "bv": jax.random.normal(keys[5], (d_model,), jnp.float32) * scale,
        "wm": jax.random.normal(keys[6], (d_model, d_model), jnp.float32) * scale,
        "bm": jax.random.normal(keys[7], (d_model,), jnp.float32) * scale,
    }

    query = jax.random.normal(keys[8], (B, d_model, N), jnp.float32)
    key_ = jax.random.normal(keys[9], (B, d_model, N), jnp.float32)
    value = jax.random.normal(keys[10], (B, d_model, N), jnp.float32)

    # One-time weight preparation (regroup + scale fold + bf16 cast).
    prepared = prepare_mha_params(params, num_heads, d_model)

    out = multi_headed_attention(query, key_, value, prepared, num_heads)
    out = jax.block_until_ready(out)

    ref = reference_forward(query, key_, value, params, num_heads)
    assert out.shape == (B, d_model, N)

    # Tolerance relaxed vs. a pure-f32 path: MXU operands are bf16 (f32
    # accumulation) and softmax normalization uses the EUP approx reciprocal.
    max_err = float(jnp.max(jnp.abs(out - ref)))
    rel_err = float(jnp.linalg.norm(out - ref) / jnp.linalg.norm(ref))
    assert max_err < 1.5e-1 and rel_err < 2e-2, (
        f"mismatch vs reference: max={max_err}, rel={rel_err}")

    print("KERNEL_OK")
</pallas_src>

<mosaic_0001>
module attributes {stable_mosaic.version = 11 : i64} {
  func.func @mha_fused_kernel(%arg0: i32, %arg1: i32, %arg2: memref<1x32x128xf32, #tpu.memory_space<vmem>>, %arg3: memref<1x32x128xf32, #tpu.memory_space<vmem>>, %arg4: memref<1x32x128xf32, #tpu.memory_space<vmem>>, %arg5: memref<32x32xbf16, #tpu.memory_space<vmem>>, %arg6: memref<32x32xbf16, #tpu.memory_space<vmem>>, %arg7: memref<32x32xbf16, #tpu.memory_space<vmem>>, %arg8: memref<32x32xbf16, #tpu.memory_space<vmem>>, %arg9: memref<32x1xf32, #tpu.memory_space<vmem>>, %arg10: memref<32x1xf32, #tpu.memory_space<vmem>>, %arg11: memref<32x1xf32, #tpu.memory_space<vmem>>, %arg12: memref<32x1xf32, #tpu.memory_space<vmem>>, %arg13: memref<1x32x128xf32, #tpu.memory_space<vmem>>, %arg14: memref<32x128xbf16, #tpu.memory_space<vmem>>, %arg15: memref<32x128xbf16, #tpu.memory_space<vmem>>, %arg16: memref<32x128xf32, #tpu.memory_space<vmem>>) attributes {dimension_semantics = [#tpu.dimension_semantics<parallel>, #tpu.dimension_semantics<arbitrary>], iteration_bounds = array<i64: 2, 1>, scalar_prefetch = 0 : i64, scratch_operands = 3 : i64, tpu.core_type = #tpu.core_type<tc>, window_params = [{transform_indices = @transform_0, window_bounds = array<i64: 1, 32, 128>}, {transform_indices = @transform_1, window_bounds = array<i64: 1, 32, 128>}, {transform_indices = @transform_2, window_bounds = array<i64: 1, 32, 128>}, {pipeline_mode = #tpu.pipeline_mode<synchronous>, transform_indices = @transform_3, window_bounds = array<i64: 32, 32>}, {pipeline_mode = #tpu.pipeline_mode<synchronous>, transform_indices = @transform_4, window_bounds = array<i64: 32, 32>}, {pipeline_mode = #tpu.pipeline_mode<synchronous>, transform_indices = @transform_5, window_bounds = array<i64: 32, 32>}, {pipeline_mode = #tpu.pipeline_mode<synchronous>, transform_indices = @transform_6, window_bounds = array<i64: 32, 32>}, {pipeline_mode = #tpu.pipeline_mode<synchronous>, transform_indices = @transform_7, window_bounds = array<i64: 32, 1>}, {pipeline_mode = #tpu.pipeline_mode<synchronous>, transform_indices = @transform_8, window_bounds = array<i64: 32, 1>}, {pipeline_mode = #tpu.pipeline_mode<synchronous>, transform_indices = @transform_9, window_bounds = array<i64: 32, 1>}, {pipeline_mode = #tpu.pipeline_mode<synchronous>, transform_indices = @transform_10, window_bounds = array<i64: 32, 1>}, {transform_indices = @transform_11, window_bounds = array<i64: 1, 32, 128>}]} {
    %c0_i32 = arith.constant 0 : i32
    %0 = arith.cmpi eq, %arg1, %c0_i32 : i32
    %1 = arith.extui %0 : i1 to i32
    %c0_i32_0 = arith.constant 0 : i32
    %2 = arith.cmpi ne, %1, %c0_i32_0 : i32
    scf.if %2 {
      %c0_44 = arith.constant 0 : index
      %c0_45 = arith.constant 0 : index
      %c0_46 = arith.constant 0 : index
      %106 = vector.load %arg3[%c0_44, %c0_45, %c0_46] : memref<1x32x128xf32, #tpu.memory_space<vmem>>, vector<1x32x128xf32>
      %107 = vector.shape_cast %106 : vector<1x32x128xf32> to vector<32x128xf32>
      %108 = arith.truncf %107 : vector<32x128xf32> to vector<32x128xbf16>
      %c0_47 = arith.constant 0 : index
      %c0_48 = arith.constant 0 : index
      %c0_49 = arith.constant 0 : index
      %109 = vector.load %arg4[%c0_47, %c0_48, %c0_49] : memref<1x32x128xf32, #tpu.memory_space<vmem>>, vector<1x32x128xf32>
      %110 = vector.shape_cast %109 : vector<1x32x128xf32> to vector<32x128xf32>
      %111 = arith.truncf %110 : vector<32x128xf32> to vector<32x128xbf16>
      %c0_50 = arith.constant 0 : index
      %c0_51 = arith.constant 0 : index
      %112 = vector.load %arg6[%c0_50, %c0_51] : memref<32x32xbf16, #tpu.memory_space<vmem>>, vector<32x32xbf16>
      %cst_52 = arith.constant dense<0.000000e+00> : vector<32x128xf32>
      %113 = tpu.matmul %112, %108, %cst_52 {dimension_numbers = #tpu.dot_dimension_numbers<[1], [0], [0], [1], [0, 0, 1, 1], [], []>} : vector<32x32xbf16>, vector<32x128xbf16>, vector<32x128xf32> -> vector<32x128xf32>
      %c0_53 = arith.constant 0 : index
      %c0_54 = arith.constant 0 : index
      %114 = vector.load %arg10[%c0_53, %c0_54] : memref<32x1xf32, #tpu.memory_space<vmem>>, vector<32x1xf32>
      %115 = vector.broadcast %114 : vector<32x1xf32> to vector<32x128xf32>
      %116 = arith.addf %113, %115 : vector<32x128xf32>
      %117 = arith.truncf %116 : vector<32x128xf32> to vector<32x128xbf16>
      %c0_55 = arith.constant 0 : index
      %c0_56 = arith.constant 0 : index
      %118 = vector.load %arg14[%c0_55, %c0_56] : memref<32x128xbf16, #tpu.memory_space<vmem>>, vector<32x128xbf16>
      tpu.vector_store %arg14[%c0_55, %c0_56], %117 {strides = array<i32>} : memref<32x128xbf16, #tpu.memory_space<vmem>>, vector<32x128xbf16>,
      %c0_57 = arith.constant 0 : index
      %c0_58 = arith.constant 0 : index
      %119 = vector.load %arg7[%c0_57, %c0_58] : memref<32x32xbf16, #tpu.memory_space<vmem>>, vector<32x32xbf16>
      %cst_59 = arith.constant dense<0.000000e+00> : vector<32x128xf32>
      %120 = tpu.matmul %119, %111, %cst_59 {dimension_numbers = #tpu.dot_dimension_numbers<[1], [0], [0], [1], [0, 0, 1, 1], [], []>} : vector<32x32xbf16>, vector<32x128xbf16>, vector<32x128xf32> -> vector<32x128xf32>
      %c0_60 = arith.constant 0 : index
      %c0_61 = arith.constant 0 : index
      %121 = vector.load %arg11[%c0_60, %c0_61] : memref<32x1xf32, #tpu.memory_space<vmem>>, vector<32x1xf32>
      %122 = vector.broadcast %121 : vector<32x1xf32> to vector<32x128xf32>
      %123 = arith.addf %120, %122 : vector<32x128xf32>
      %124 = arith.truncf %123 : vector<32x128xf32> to vector<32x128xbf16>
      %c0_62 = arith.constant 0 : index
      %c0_63 = arith.constant 0 : index
      %125 = vector.load %arg15[%c0_62, %c0_63] : memref<32x128xbf16, #tpu.memory_space<vmem>>, vector<32x128xbf16>
      tpu.vector_store %arg15[%c0_62, %c0_63], %124 {strides = array<i32>} : memref<32x128xbf16, #tpu.memory_space<vmem>>, vector<32x128xbf16>,
    } else {
    }
    %c0 = arith.constant 0 : index
    %c0_1 = arith.constant 0 : index
    %c0_2 = arith.constant 0 : index
    %3 = vector.load %arg2[%c0, %c0_1, %c0_2] : memref<1x32x128xf32, #tpu.memory_space<vmem>>, vector<1x32x128xf32>
    %4 = vector.shape_cast %3 : vector<1x32x128xf32> to vector<32x128xf32>
    %5 = arith.truncf %4 : vector<32x128xf32> to vector<32x128xbf16>
    %c0_3 = arith.constant 0 : index
    %c0_4 = arith.constant 0 : index
    %6 = vector.load %arg5[%c0_3, %c0_4] : memref<32x32xbf16, #tpu.memory_space<vmem>>, vector<32x32xbf16>
    %cst = arith.constant dense<0.000000e+00> : vector<32x128xf32>
    %7 = tpu.matmul %6, %5, %cst {dimension_numbers = #tpu.dot_dimension_numbers<[1], [0], [0], [1], [0, 0, 1, 1], [], []>} : vector<32x32xbf16>, vector<32x128xbf16>, vector<32x128xf32> -> vector<32x128xf32>
    %c0_5 = arith.constant 0 : index
    %c0_6 = arith.constant 0 : index
    %8 = vector.load %arg9[%c0_5, %c0_6] : memref<32x1xf32, #tpu.memory_space<vmem>>, vector<32x1xf32>
    %9 = vector.broadcast %8 : vector<32x1xf32> to vector<32x128xf32>
    %10 = arith.addf %7, %9 : vector<32x128xf32>
    %11 = arith.truncf %10 : vector<32x128xf32> to vector<32x128xbf16>
    %c0_7 = arith.constant 0 : index
    %c0_8 = arith.constant 0 : index
    %12 = vector.load %arg14[%c0_7, %c0_8] : memref<32x128xbf16, #tpu.memory_space<vmem>>, vector<32x128xbf16>
    %c0_9 = arith.constant 0 : index
    %c0_10 = arith.constant 0 : index
    %13 = vector.load %arg15[%c0_9, %c0_10] : memref<32x128xbf16, #tpu.memory_space<vmem>>, vector<32x128xbf16>
    %14 = tpu.iota {dimensions = array<i32: 1>} : vector<1x128xi32>
    %c16_i32 = arith.constant 16 : i32
    %15 = vector.broadcast %c16_i32 : i32 to vector<1x128xi32>
    %16 = arith.cmpi slt, %14, %15 : vector<1x128xi32>
    %cst_11 = arith.constant 0.000000e+00 : f32
    %cst_12 = arith.constant -1.000000e+30 : f32
    %17 = vector.broadcast %cst_11 : f32 to vector<1x128xf32>
    %18 = vector.broadcast %cst_12 : f32 to vector<1x128xf32>
    %19 = arith.select %16, %17, %18 : vector<1x128xi1>, vector<1x128xf32>
    %20 = vector.extract_strided_slice %11 {offsets = [0, 0], sizes = [8, 128], strides = [1, 1]} : vector<32x128xbf16> to vector<8x128xbf16>
    %21 = vector.extract_strided_slice %12 {offsets = [0, 0], sizes = [8, 128], strides = [1, 1]} : vector<32x128xbf16> to vector<8x128xbf16>
    %22 = vector.extract_strided_slice %13 {offsets = [0, 0], sizes = [8, 128], strides = [1, 1]} : vector<32x128xbf16> to vector<8x128xbf16>
    %cst_13 = arith.constant dense<0.000000e+00> : vector<128x128xf32>
    %23 = tpu.matmul %20, %21, %cst_13 {dimension_numbers = #tpu.dot_dimension_numbers<[0], [0], [1], [1], [0, 1, 1, 1], [], []>} : vector<8x128xbf16>, vector<8x128xbf16>, vector<128x128xf32> -> vector<128x128xf32>
    %24 = vector.broadcast %19 : vector<1x128xf32> to vector<128x128xf32>
    %25 = arith.addf %23, %24 : vector<128x128xf32>
    %cst_14 = arith.constant dense<0xFF800000> : vector<128xf32>
    %26 = vector.multi_reduction <maximumf>, %25, %cst_14 [1] : vector<128x128xf32> to vector<128xf32>
    %27 = vector.shape_cast %26 : vector<128xf32> to vector<128x1xf32>
    %28 = vector.broadcast %27 : vector<128x1xf32> to vector<128x128xf32>
    %29 = arith.subf %25, %28 : vector<128x128xf32>
    %30 = math.exp %29 : vector<128x128xf32>
    %cst_15 = arith.constant dense<0.000000e+00> : vector<128xf32>
    %31 = vector.multi_reduction <add>, %30, %cst_15 [1] : vector<128x128xf32> to vector<128xf32>
    %32 = vector.shape_cast %31 : vector<128xf32> to vector<128x1xf32>
    %33 = tpu.reciprocal %32 {approx = true} : vector<128x1xf32> -> vector<128x1xf32>
    %34 = vector.broadcast %33 : vector<128x1xf32> to vector<128x128xf32>
    %35 = arith.mulf %30, %34 : vector<128x128xf32>
    %36 = arith.truncf %35 : vector<128x128xf32> to vector<128x128xbf16>
    %cst_16 = arith.constant dense<0.000000e+00> : vector<8x128xf32>
    %37 = tpu.matmul %22, %36, %cst_16 {dimension_numbers = #tpu.dot_dimension_numbers<[1], [1], [0], [0], [0, 0, 1, 0], [], []>} : vector<8x128xbf16>, vector<128x128xbf16>, vector<8x128xf32> -> vector<8x128xf32>
    %c0_17 = arith.constant 0 : index
    %c0_18 = arith.constant 0 : index
    %38 = vector.load %arg16[%c0_17, %c0_18] : memref<32x128xf32, #tpu.memory_space<vmem>>, vector<8x128xf32>
    tpu.vector_store %arg16[%c0_17, %c0_18], %37 {strides = array<i32>} : memref<32x128xf32, #tpu.memory_space<vmem>>, vector<8x128xf32>,
    %39 = vector.extract_strided_slice %11 {offsets = [8, 0], sizes = [8, 128], strides = [1, 1]} : vector<32x128xbf16> to vector<8x128xbf16>
    %40 = vector.extract_strided_slice %12 {offsets = [8, 0], sizes = [8, 128], strides = [1, 1]} : vector<32x128xbf16> to vector<8x128xbf16>
    %41 = vector.extract_strided_slice %13 {offsets = [8, 0], sizes = [8, 128], strides = [1, 1]} : vector<32x128xbf16> to vector<8x128xbf16>
    %cst_19 = arith.constant dense<0.000000e+00> : vector<128x128xf32>
    %42 = tpu.matmul %39, %40, %cst_19 {dimension_numbers = #tpu.dot_dimension_numbers<[0], [0], [1], [1], [0, 1, 1, 1], [], []>} : vector<8x128xbf16>, vector<8x128xbf16>, vector<128x128xf32> -> vector<128x128xf32>
    %43 = vector.broadcast %19 : vector<1x128xf32> to vector<128x128xf32>
    %44 = arith.addf %42, %43 : vector<128x128xf32>
    %cst_20 = arith.constant dense<0xFF800000> : vector<128xf32>
    %45 = vector.multi_reduction <maximumf>, %44, %cst_20 [1] : vector<128x128xf32> to vector<128xf32>
    %46 = vector.shape_cast %45 : vector<128xf32> to vector<128x1xf32>
    %47 = vector.broadcast %46 : vector<128x1xf32> to vector<128x128xf32>
    %48 = arith.subf %44, %47 : vector<128x128xf32>
    %49 = math.exp %48 : vector<128x128xf32>
    %cst_21 = arith.constant dense<0.000000e+00> : vector<128xf32>
    %50 = vector.multi_reduction <add>, %49, %cst_21 [1] : vector<128x128xf32> to vector<128xf32>
    %51 = vector.shape_cast %50 : vector<128xf32> to vector<128x1xf32>
    %52 = tpu.reciprocal %51 {approx = true} : vector<128x1xf32> -> vector<128x1xf32>
    %53 = vector.broadcast %52 : vector<128x1xf32> to vector<128x128xf32>
    %54 = arith.mulf %49, %53 : vector<128x128xf32>
    %55 = arith.truncf %54 : vector<128x128xf32> to vector<128x128xbf16>
    %cst_22 = arith.constant dense<0.000000e+00> : vector<8x128xf32>
    %56 = tpu.matmul %41, %55, %cst_22 {dimension_numbers = #tpu.dot_dimension_numbers<[1], [1], [0], [0], [0, 0, 1, 0], [], []>} : vector<8x128xbf16>, vector<128x128xbf16>, vector<8x128xf32> -> vector<8x128xf32>
    %c8 = arith.constant 8 : index
    %c0_23 = arith.constant 0 : index
    %57 = vector.load %arg16[%c8, %c0_23] : memref<32x128xf32, #tpu.memory_space<vmem>>, vector<8x128xf32>
    tpu.vector_store %arg16[%c8, %c0_23], %56 {strides = array<i32>} : memref<32x128xf32, #tpu.memory_space<vmem>>, vector<8x128xf32>,
    %58 = vector.extract_strided_slice %11 {offsets = [16, 0], sizes = [8, 128], strides = [1, 1]} : vector<32x128xbf16> to vector<8x128xbf16>
    %59 = vector.extract_strided_slice %12 {offsets = [16, 0], sizes = [8, 128], strides = [1, 1]} : vector<32x128xbf16> to vector<8x128xbf16>
    %60 = vector.extract_strided_slice %13 {offsets = [16, 0], sizes = [8, 128], strides = [1, 1]} : vector<32x128xbf16> to vector<8x128xbf16>
    %cst_24 = arith.constant dense<0.000000e+00> : vector<128x128xf32>
    %61 = tpu.matmul %58, %59, %cst_24 {dimension_numbers = #tpu.dot_dimension_numbers<[0], [0], [1], [1], [0, 1, 1, 1], [], []>} : vector<8x128xbf16>, vector<8x128xbf16>, vector<128x128xf32> -> vector<128x128xf32>
    %62 = vector.broadcast %19 : vector<1x128xf32> to vector<128x128xf32>
    %63 = arith.addf %61, %62 : vector<128x128xf32>
    %cst_25 = arith.constant dense<0xFF800000> : vector<128xf32>
    %64 = vector.multi_reduction <maximumf>, %63, %cst_25 [1] : vector<128x128xf32> to vector<128xf32>
    %65 = vector.shape_cast %64 : vector<128xf32> to vector<128x1xf32>
    %66 = vector.broadcast %65 : vector<128x1xf32> to vector<128x128xf32>
    %67 = arith.subf %63, %66 : vector<128x128xf32>
    %68 = math.exp %67 : vector<128x128xf32>
    %cst_26 = arith.constant dense<0.000000e+00> : vector<128xf32>
    %69 = vector.multi_reduction <add>, %68, %cst_26 [1] : vector<128x128xf32> to vector<128xf32>
    %70 = vector.shape_cast %69 : vector<128xf32> to vector<128x1xf32>
    %71 = tpu.reciprocal %70 {approx = true} : vector<128x1xf32> -> vector<128x1xf32>
    %72 = vector.broadcast %71 : vector<128x1xf32> to vector<128x128xf32>
    %73 = arith.mulf %68, %72 : vector<128x128xf32>
    %74 = arith.truncf %73 : vector<128x128xf32> to vector<128x128xbf16>
    %cst_27 = arith.constant dense<0.000000e+00> : vector<8x128xf32>
    %75 = tpu.matmul %60, %74, %cst_27 {dimension_numbers = #tpu.dot_dimension_numbers<[1], [1], [0], [0], [0, 0, 1, 0], [], []>} : vector<8x128xbf16>, vector<128x128xbf16>, vector<8x128xf32> -> vector<8x128xf32>
    %c16 = arith.constant 16 : index
    %c0_28 = arith.constant 0 : index
    %76 = vector.load %arg16[%c16, %c0_28] : memref<32x128xf32, #tpu.memory_space<vmem>>, vector<8x128xf32>
    tpu.vector_store %arg16[%c16, %c0_28], %75 {strides = array<i32>} : memref<32x128xf32, #tpu.memory_space<vmem>>, vector<8x128xf32>,
    %77 = vector.extract_strided_slice %11 {offsets = [24, 0], sizes = [8, 128], strides = [1, 1]} : vector<32x128xbf16> to vector<8x128xbf16>
    %78 = vector.extract_strided_slice %12 {offsets = [24, 0], sizes = [8, 128], strides = [1, 1]} : vector<32x128xbf16> to vector<8x128xbf16>
    %79 = vector.extract_strided_slice %13 {offsets = [24, 0], sizes = [8, 128], strides = [1, 1]} : vector<32x128xbf16> to vector<8x128xbf16>
    %cst_29 = arith.constant dense<0.000000e+00> : vector<128x128xf32>
    %80 = tpu.matmul %77, %78, %cst_29 {dimension_numbers = #tpu.dot_dimension_numbers<[0], [0], [1], [1], [0, 1, 1, 1], [], []>} : vector<8x128xbf16>, vector<8x128xbf16>, vector<128x128xf32> -> vector<128x128xf32>
    %81 = vector.broadcast %19 : vector<1x128xf32> to vector<128x128xf32>
    %82 = arith.addf %80, %81 : vector<128x128xf32>
    %cst_30 = arith.constant dense<0xFF800000> : vector<128xf32>
    %83 = vector.multi_reduction <maximumf>, %82, %cst_30 [1] : vector<128x128xf32> to vector<128xf32>
    %84 = vector.shape_cast %83 : vector<128xf32> to vector<128x1xf32>
    %85 = vector.broadcast %84 : vector<128x1xf32> to vector<128x128xf32>
    %86 = arith.subf %82, %85 : vector<128x128xf32>
    %87 = math.exp %86 : vector<128x128xf32>
    %cst_31 = arith.constant dense<0.000000e+00> : vector<128xf32>
    %88 = vector.multi_reduction <add>, %87, %cst_31 [1] : vector<128x128xf32> to vector<128xf32>
    %89 = vector.shape_cast %88 : vector<128xf32> to vector<128x1xf32>
    %90 = tpu.reciprocal %89 {approx = true} : vector<128x1xf32> -> vector<128x1xf32>
    %91 = vector.broadcast %90 : vector<128x1xf32> to vector<128x128xf32>
    %92 = arith.mulf %87, %91 : vector<128x128xf32>
    %93 = arith.truncf %92 : vector<128x128xf32> to vector<128x128xbf16>
    %cst_32 = arith.constant dense<0.000000e+00> : vector<8x128xf32>
    %94 = tpu.matmul %79, %93, %cst_32 {dimension_numbers = #tpu.dot_dimension_numbers<[1], [1], [0], [0], [0, 0, 1, 0], [], []>} : vector<8x128xbf16>, vector<128x128xbf16>, vector<8x128xf32> -> vector<8x128xf32>
    %c24 = arith.constant 24 : index
    %c0_33 = arith.constant 0 : index
    %95 = vector.load %arg16[%c24, %c0_33] : memref<32x128xf32, #tpu.memory_space<vmem>>, vector<8x128xf32>
    tpu.vector_store %arg16[%c24, %c0_33], %94 {strides = array<i32>} : memref<32x128xf32, #tpu.memory_space<vmem>>, vector<8x128xf32>,
    %c0_34 = arith.constant 0 : index
    %c0_35 = arith.constant 0 : index
    %96 = vector.load %arg16[%c0_34, %c0_35] : memref<32x128xf32, #tpu.memory_space<vmem>>, vector<32x128xf32>
    %97 = arith.truncf %96 : vector<32x128xf32> to vector<32x128xbf16>
    %c0_36 = arith.constant 0 : index
    %c0_37 = arith.constant 0 : index
    %98 = vector.load %arg8[%c0_36, %c0_37] : memref<32x32xbf16, #tpu.memory_space<vmem>>, vector<32x32xbf16>
    %cst_38 = arith.constant dense<0.000000e+00> : vector<32x128xf32>
    %99 = tpu.matmul %98, %97, %cst_38 {dimension_numbers = #tpu.dot_dimension_numbers<[1], [0], [0], [1], [0, 0, 1, 1], [], []>} : vector<32x32xbf16>, vector<32x128xbf16>, vector<32x128xf32> -> vector<32x128xf32>
    %c0_39 = arith.constant 0 : index
    %c0_40 = arith.constant 0 : index
    %100 = vector.load %arg12[%c0_39, %c0_40] : memref<32x1xf32, #tpu.memory_space<vmem>>, vector<32x1xf32>
    %101 = vector.broadcast %100 : vector<32x1xf32> to vector<32x128xf32>
    %102 = arith.addf %99, %101 : vector<32x128xf32>
    %c0_41 = arith.constant 0 : index
    %c0_42 = arith.constant 0 : index
    %c0_43 = arith.constant 0 : index
    %103 = vector.load %arg13[%c0_41, %c0_42, %c0_43] : memref<1x32x128xf32, #tpu.memory_space<vmem>>, vector<1x32x128xf32>
    %104 = vector.shape_cast %103 : vector<1x32x128xf32> to vector<32x128xf32>
    %105 = vector.shape_cast %102 : vector<32x128xf32> to vector<1x32x128xf32>
    tpu.vector_store %arg13[%c0_41, %c0_42, %c0_43], %105 {strides = array<i32>} : memref<1x32x128xf32, #tpu.memory_space<vmem>>, vector<1x32x128xf32>,
    return
  }
  func.func @transform_0(%arg0: i32, %arg1: i32) -> (i32, i32, i32) {
    %c0_i32 = arith.constant 0 : i32
    %c0_i32_0 = arith.constant 0 : i32
    return %arg0, %c0_i32, %arg1 : i32, i32, i32
  }
  func.func @transform_1(%arg0: i32, %arg1: i32) -> (i32, i32, i32) {
    %c0_i32 = arith.constant 0 : i32
    %c0_i32_0 = arith.constant 0 : i32
    %c0_i32_1 = arith.constant 0 : i32
    return %arg0, %c0_i32, %c0_i32_0 : i32, i32, i32
  }
  func.func @transform_2(%arg0: i32, %arg1: i32) -> (i32, i32, i32) {
    %c0_i32 = arith.constant 0 : i32
    %c0_i32_0 = arith.constant 0 : i32
    %c0_i32_1 = arith.constant 0 : i32
    return %arg0, %c0_i32, %c0_i32_0 : i32, i32, i32
  }
  func.func @transform_3(%arg0: i32, %arg1: i32) -> (i32, i32) {
    %c0_i32 = arith.constant 0 : i32
    %c0_i32_0 = arith.constant 0 : i32
    %c0_i32_1 = arith.constant 0 : i32
    return %c0_i32, %c0_i32_0 : i32, i32
  }
  func.func @transform_4(%arg0: i32, %arg1: i32) -> (i32, i32) {
    %c0_i32 = arith.constant 0 : i32
    %c0_i32_0 = arith.constant 0 : i32
    %c0_i32_1 = arith.constant 0 : i32
    return %c0_i32, %c0_i32_0 : i32, i32
  }
  func.func @transform_5(%arg0: i32, %arg1: i32) -> (i32, i32) {
    %c0_i32 = arith.constant 0 : i32
    %c0_i32_0 = arith.constant 0 : i32
    %c0_i32_1 = arith.constant 0 : i32
    return %c0_i32, %c0_i32_0 : i32, i32
  }
  func.func @transform_6(%arg0: i32, %arg1: i32) -> (i32, i32) {
    %c0_i32 = arith.constant 0 : i32
    %c0_i32_0 = arith.constant 0 : i32
    %c0_i32_1 = arith.constant 0 : i32
    return %c0_i32, %c0_i32_0 : i32, i32
  }
  func.func @transform_7(%arg0: i32, %arg1: i32) -> (i32, i32) {
    %c0_i32 = arith.constant 0 : i32
    %c0_i32_0 = arith.constant 0 : i32
    %c0_i32_1 = arith.constant 0 : i32
    return %c0_i32, %c0_i32_0 : i32, i32
  }
  func.func @transform_8(%arg0: i32, %arg1: i32) -> (i32, i32) {
    %c0_i32 = arith.constant 0 : i32
    %c0_i32_0 = arith.constant 0 : i32
    %c0_i32_1 = arith.constant 0 : i32
    return %c0_i32, %c0_i32_0 : i32, i32
  }
  func.func @transform_9(%arg0: i32, %arg1: i32) -> (i32, i32) {
    %c0_i32 = arith.constant 0 : i32
    %c0_i32_0 = arith.constant 0 : i32
    %c0_i32_1 = arith.constant 0 : i32
    return %c0_i32, %c0_i32_0 : i32, i32
  }
  func.func @transform_10(%arg0: i32, %arg1: i32) -> (i32, i32) {
    %c0_i32 = arith.constant 0 : i32
    %c0_i32_0 = arith.constant 0 : i32
    %c0_i32_1 = arith.constant 0 : i32
    return %c0_i32, %c0_i32_0 : i32, i32
  }
  func.func @transform_11(%arg0: i32, %arg1: i32) -> (i32, i32, i32) {
    %c0_i32 = arith.constant 0 : i32
    %c0_i32_0 = arith.constant 0 : i32
    return %arg0, %c0_i32, %arg1 : i32, i32, i32
  }
}

</mosaic_0001>

<llo_original>
// kernel: tpu_custom_call.1
$region0: #{tpu_custom_call.1}
  #allocation0 [shape = 'u32[]', space=smem, size = 0x4, offset = 0x4, fixed_abs, tag = 'smem constant byte address 0x4 - core index']
  #allocation1 [shape = 'u32[144,128]{1,0:T(1,128)}', space=vmem, size = 0x12000, scoped, tag = 'internal scratch']
  #allocation2 [shape = 'bf16[32,128]{1,0:T(8,128)(2,1)}', space=vmem, size = 0x2000, scoped, tag = 'scratch operand']
  #allocation3 [shape = 'bf16[32,128]{1,0:T(8,128)(2,1)}', space=vmem, size = 0x2000, scoped, tag = 'scratch operand']
  #allocation4 [shape = 'f32[32,128]{1,0:T(8,128)}', space=vmem, size = 0x4000, scoped, tag = 'scratch operand']
  %s0 = inlined_call_operand.vmem [shape: f32[2,32,128], index: 0, kind: input, shape index: {}]
  %s1 = inlined_call_operand.vmem [shape: f32[2,32,128], index: 1, kind: input, shape index: {}]
  %s2 = inlined_call_operand.hbm [shape: f32[2,32,128], index: 2, kind: input, shape index: {}]
  %s3 = inlined_call_operand.hbm [shape: bf16[32,32], index: 3, kind: input, shape index: {}]
  %s4 = inlined_call_operand.hbm [shape: bf16[32,32], index: 4, kind: input, shape index: {}]
  %s5 = inlined_call_operand.hbm [shape: bf16[32,32], index: 5, kind: input, shape index: {}]
  %s6 = inlined_call_operand.hbm [shape: bf16[32,32], index: 6, kind: input, shape index: {}]
  %s7 = inlined_call_operand.vmem [shape: f32[32,1], index: 7, kind: input, shape index: {}]
  %s8 = inlined_call_operand.vmem [shape: f32[32,1], index: 8, kind: input, shape index: {}]
  %s9 = inlined_call_operand.vmem [shape: f32[32,1], index: 9, kind: input, shape index: {}]
  %s10 = inlined_call_operand.vmem [shape: f32[32,1], index: 10, kind: input, shape index: {}]
  %s11 = inlined_call_operand.hbm [shape: f32[2,32,128], index: 11, kind: output, shape index: {}]
  %s12 = sld [smem:[#allocation0]]
  $region101: #{tpu_custom_call.1} parent=0
    _
  %s14 = ssub.s32 1, %s12
  %s15 = scalar_select 0, %s14, %s12
  $region1: #{tpu_custom_call.1} parent=0
    #allocation5 [shape = 'u8[32768]{0}', space=vmem, size = 0x8000, scoped, tag = 'input window, operand 2']
    #allocation6 [shape = 's32[2]{0}', space=sflag, size = 0x8, scoped, tag = 'scoped memory for tpu_custom_call.1']
    #allocation7 [shape = 's32[2]{0}', space=sflag, size = 0x8, scoped, tag = 'scoped memory for tpu_custom_call.1']
    #allocation8 [shape = 'u8[8192]{0}', space=vmem, size = 0x2000, scoped, tag = 'input window, operand 3, single buffered']
    #allocation9 [shape = 's32[1]{0}', space=sflag, size = 0x4, scoped, tag = 'scoped memory for tpu_custom_call.1']
    #allocation10 [shape = 'u8[8192]{0}', space=vmem, size = 0x2000, scoped, tag = 'input window, operand 4, single buffered']
    #allocation11 [shape = 'u8[8192]{0}', space=vmem, size = 0x2000, scoped, tag = 'input window, operand 5, single buffered']
    #allocation12 [shape = 's32[1]{0}', space=sflag, size = 0x4, scoped, tag = 'scoped memory for tpu_custom_call.1']
    #allocation13 [shape = 'u8[8192]{0}', space=vmem, size = 0x2000, scoped, tag = 'input window, operand 6, single buffered']
    #allocation14 [shape = 'u8[32768]{0}', space=vmem, size = 0x8000, scoped, tag = 'output window, operand 0']
    %16 = vsyncpa [#allocation6], 0
    %s17 = scalar_lea.sflag [#allocation6], 1
    %18 = vsyncpa %s17, 0
    %19 = vsyncpa [#allocation9], 0
    %20 = vsyncpa [#allocation12], 0
    %21 = vsyncpa [#allocation7], 0
    %s22 = scalar_lea.sflag [#allocation7], 1
    %23 = vsyncpa %s22, 0
    loop: start=0, step=1, limit=4
    $region2: #{tpu_custom_call.1} parent=1 // loop_pre_header
      _
    $region3: #{tpu_custom_call.1} parent=1 // loop_header
      %s25 = sphi 0, %s29
      %p26 = scmp.ge.s32.totalorder %s25, 4
      %s32 = sphi 0, %s44
      %s33 = sphi 0, %s40
      %s34 = sphi 0, %s32
      %s35 = sphi 0, %s33
      %s36 = sphi 0, %s34
      %s37 = sphi 0, %s35
      %s49 = sphi 0, %s51
      %s52 = sphi 0, %s49
      %s53 = sphi 0, %s52
      %s69 = sphi 0, %s53
      %s75 = sphi 0, %s77
      %s78 = sphi 0, %s75
      %s79 = sphi 0, %s78
      %s95 = sphi 0, %s79
      %s101 = sphi 0, %s103
      %s104 = sphi 0, %s101
      %s105 = sphi 0, %s104
      %s121 = sphi 0, %s105
      %s125 = sphi 0, %s125
      %s127 = sphi 0, %s125
      %s128 = sphi 0, %s127
      %s142 = sphi 0, %s128
      %s146 = sphi 0, %s146
      %s148 = sphi 0, %s146
      %s149 = sphi 0, %s148
      %s163 = sphi 0, %s149
      %s167 = sphi 0, %s167
      %s169 = sphi 0, %s167
      %s170 = sphi 0, %s169
      %s184 = sphi 0, %s170
      %s188 = sphi 0, %s188
      %s190 = sphi 0, %s188
      %s191 = sphi 0, %s190
      %s205 = sphi 0, %s191
      %s209 = sphi 0, %s209
      %s211 = sphi 0, %s209
      %s212 = sphi 0, %s211
      %s226 = sphi 0, %s212
      %s230 = sphi 0, %s230
      %s232 = sphi 0, %s230
      %s233 = sphi 0, %s232
      %s247 = sphi 0, %s233
      %s251 = sphi 0, %s251
      %s253 = sphi 0, %s251
      %s254 = sphi 0, %s253
      %s268 = sphi 0, %s254
      %s272 = sphi 0, %s272
      %s274 = sphi 0, %s272
      %s275 = sphi 0, %s274
      %s289 = sphi 0, %s275
      %s297 = sphi 0, %s299
      %s300 = sphi 0, %s297
      %s301 = sphi 0, %s300
      %s317 = sphi 0, %s301
    $region4: #{tpu_custom_call.1} parent=1 // loop_header_branch
      %28 = sbr.rel (%p26) target = $region8
    $region5: #{tpu_custom_call.1} parent=1 // loop_body
      %s30 = ssub.s32 %s25, 1
      %s31 = ssub.s32 %s25, 2
      %s38 = sadd.s32 1, %s33
      %p39 = scmp.ge.s32.totalorder %s38, 1
      %s40 = scalar_select %p39, 0, %s38
      %s41 = sadd.s32 1, %s32
      %s42 = scalar_select %p39, %s41, %s32
      %p43 = scmp.ge.s32.totalorder %s42, 2
      %s44 = scalar_select %p43, 0, %s42
      %s45 = ssub.s32 %s32, %s44
      %s46 = ssub.s32 %s33, %s40
      %s47 = sor.u32 %s45, %s46
      %p48 = scmp.eq.s32.totalorder %s47, 0
      %s50 = sadd.s32 %s49, 1
      %s51 = scalar_select %p48, %s49, %s50
      %p54 = pneg %p48
      %p55 = scmp.eq.s32.totalorder %s25, 1
      %p56 = por %p54, %p55
      %p57 = scmp.ne.s32.totalorder %s49, %s52
      %p58 = scmp.eq.s32.totalorder %s25, 0
      %p59 = por %p57, %p58
      %p60 = scmp.ne.s32.totalorder %s49, %s52
      %p61 = scmp.eq.s32.totalorder %s30, 1
      %p62 = por %p60, %p61
      %p63 = scmp.ne.s32.totalorder %s52, %s53
      %p64 = scmp.eq.s32.totalorder %s30, 0
      %p65 = por %p63, %p64
      %p66 = scmp.ne.s32.totalorder %s52, %s53
      %p67 = scmp.eq.s32.totalorder %s31, 1
      %p68 = por %p66, %p67
      %p70 = scmp.ne.s32.totalorder %s53, %s69
      %p71 = scmp.eq.s32.totalorder %s31, 0
      %p72 = por %p70, %p71
      %s73 = ssub.s32 %s32, %s44
      %p74 = scmp.eq.s32.totalorder %s73, 0
      %s76 = sadd.s32 %s75, 1
      %s77 = scalar_select %p74, %s75, %s76
      %p80 = pneg %p74
      %p81 = scmp.eq.s32.totalorder %s25, 1
      %p82 = por %p80, %p81
      %p83 = scmp.ne.s32.totalorder %s75, %s78
      %p84 = scmp.eq.s32.totalorder %s25, 0
      %p85 = por %p83, %p84
      %p86 = scmp.ne.s32.totalorder %s75, %s78
      %p87 = scmp.eq.s32.totalorder %s30, 1
      %p88 = por %p86, %p87
      %p89 = scmp.ne.s32.totalorder %s78, %s79
      %p90 = scmp.eq.s32.totalorder %s30, 0
      %p91 = por %p89, %p90
      %p92 = scmp.ne.s32.totalorder %s78, %s79
      %p93 = scmp.eq.s32.totalorder %s31, 1
      %p94 = por %p92, %p93
      %p96 = scmp.ne.s32.totalorder %s79, %s95
      %p97 = scmp.eq.s32.totalorder %s31, 0
      %p98 = por %p96, %p97
      %s99 = ssub.s32 %s32, %s44
      %p100 = scmp.eq.s32.totalorder %s99, 0
      %s102 = sadd.s32 %s101, 1
      %s103 = scalar_select %p100, %s101, %s102
      %p106 = pneg %p100
      %p107 = scmp.eq.s32.totalorder %s25, 1
      %p108 = por %p106, %p107
      %p109 = scmp.ne.s32.totalorder %s101, %s104
      %p110 = scmp.eq.s32.totalorder %s25, 0
      %p111 = por %p109, %p110
      %p112 = scmp.ne.s32.totalorder %s101, %s104
      %p113 = scmp.eq.s32.totalorder %s30, 1
      %p114 = por %p112, %p113
      %p115 = scmp.ne.s32.totalorder %s104, %s105
      %p116 = scmp.eq.s32.totalorder %s30, 0
      %p117 = por %p115, %p116
      %p118 = scmp.ne.s32.totalorder %s104, %s105
      %p119 = scmp.eq.s32.totalorder %s31, 1
      %p120 = por %p118, %p119
      %p122 = scmp.ne.s32.totalorder %s105, %s121
      %p123 = scmp.eq.s32.totalorder %s31, 0
      %p124 = por %p122, %p123
      %s126 = sadd.s32 %s125, 1
      %p129 = scmp.eq.s32.totalorder %s25, 1
      %p130 = scmp.ne.s32.totalorder %s125, %s127
      %p131 = scmp.eq.s32.totalorder %s25, 0
      %p132 = por %p130, %p131
      %p133 = scmp.ne.s32.totalorder %s125, %s127
      %p134 = scmp.eq.s32.totalorder %s30, 1
      %p135 = por %p133, %p134
      %p136 = scmp.ne.s32.totalorder %s127, %s128
      %p137 = scmp.eq.s32.totalorder %s30, 0
      %p138 = por %p136, %p137
      %p139 = scmp.ne.s32.totalorder %s127, %s128
      %p140 = scmp.eq.s32.totalorder %s31, 1
      %p141 = por %p139, %p140
      %p143 = scmp.ne.s32.totalorder %s128, %s142
      %p144 = scmp.eq.s32.totalorder %s31, 0
      %p145 = por %p143, %p144
      %s147 = sadd.s32 %s146, 1
      %p150 = scmp.eq.s32.totalorder %s25, 1
      %p151 = scmp.ne.s32.totalorder %s146, %s148
      %p152 = scmp.eq.s32.totalorder %s25, 0
      %p153 = por %p151, %p152
      %p154 = scmp.ne.s32.totalorder %s146, %s148
      %p155 = scmp.eq.s32.totalorder %s30, 1
      %p156 = por %p154, %p155
      %p157 = scmp.ne.s32.totalorder %s148, %s149
      %p158 = scmp.eq.s32.totalorder %s30, 0
      %p159 = por %p157, %p158
      %p160 = scmp.ne.s32.totalorder %s148, %s149
      %p161 = scmp.eq.s32.totalorder %s31, 1
      %p162 = por %p160, %p161
      %p164 = scmp.ne.s32.totalorder %s149, %s163
      %p165 = scmp.eq.s32.totalorder %s31, 0
      %p166 = por %p164, %p165
      %s168 = sadd.s32 %s167, 1
      %p171 = scmp.eq.s32.totalorder %s25, 1
      %p172 = scmp.ne.s32.totalorder %s167, %s169
      %p173 = scmp.eq.s32.totalorder %s25, 0
      %p174 = por %p172, %p173
      %p175 = scmp.ne.s32.totalorder %s167, %s169
      %p176 = scmp.eq.s32.totalorder %s30, 1
      %p177 = por %p175, %p176
      %p178 = scmp.ne.s32.totalorder %s169, %s170
      %p179 = scmp.eq.s32.totalorder %s30, 0
      %p180 = por %p178, %p179
      %p181 = scmp.ne.s32.totalorder %s169, %s170
      %p182 = scmp.eq.s32.totalorder %s31, 1
      %p183 = por %p181, %p182
      %p185 = scmp.ne.s32.totalorder %s170, %s184
      %p186 = scmp.eq.s32.totalorder %s31, 0
      %p187 = por %p185, %p186
      %s189 = sadd.s32 %s188, 1
      %p192 = scmp.eq.s32.totalorder %s25, 1
      %p193 = scmp.ne.s32.totalorder %s188, %s190
      %p194 = scmp.eq.s32.totalorder %s25, 0
      %p195 = por %p193, %p194
      %p196 = scmp.ne.s32.totalorder %s188, %s190
      %p197 = scmp.eq.s32.totalorder %s30, 1
      %p198 = por %p196, %p197
      %p199 = scmp.ne.s32.totalorder %s190, %s191
      %p200 = scmp.eq.s32.totalorder %s30, 0
      %p201 = por %p199, %p200
      %p202 = scmp.ne.s32.totalorder %s190, %s191
      %p203 = scmp.eq.s32.totalorder %s31, 1
      %p204 = por %p202, %p203
      %p206 = scmp.ne.s32.totalorder %s191, %s205
      %p207 = scmp.eq.s32.totalorder %s31, 0
      %p208 = por %p206, %p207
      %s210 = sadd.s32 %s209, 1
      %p213 = scmp.eq.s32.totalorder %s25, 1
      %p214 = scmp.ne.s32.totalorder %s209, %s211
      %p215 = scmp.eq.s32.totalorder %s25, 0
      %p216 = por %p214, %p215
      %p217 = scmp.ne.s32.totalorder %s209, %s211
      %p218 = scmp.eq.s32.totalorder %s30, 1
      %p219 = por %p217, %p218
      %p220 = scmp.ne.s32.totalorder %s211, %s212
      %p221 = scmp.eq.s32.totalorder %s30, 0
      %p222 = por %p220, %p221
      %p223 = scmp.ne.s32.totalorder %s211, %s212
      %p224 = scmp.eq.s32.totalorder %s31, 1
      %p225 = por %p223, %p224
      %p227 = scmp.ne.s32.totalorder %s212, %s226
      %p228 = scmp.eq.s32.totalorder %s31, 0
      %p229 = por %p227, %p228
      %s231 = sadd.s32 %s230, 1
      %p234 = scmp.eq.s32.totalorder %s25, 1
      %p235 = scmp.ne.s32.totalorder %s230, %s232
      %p236 = scmp.eq.s32.totalorder %s25, 0
      %p237 = por %p235, %p236
      %p238 = scmp.ne.s32.totalorder %s230, %s232
      %p239 = scmp.eq.s32.totalorder %s30, 1
      %p240 = por %p238, %p239
      %p241 = scmp.ne.s32.totalorder %s232, %s233
      %p242 = scmp.eq.s32.totalorder %s30, 0
      %p243 = por %p241, %p242
      %p244 = scmp.ne.s32.totalorder %s232, %s233
      %p245 = scmp.eq.s32.totalorder %s31, 1
      %p246 = por %p244, %p245
      %p248 = scmp.ne.s32.totalorder %s233, %s247
      %p249 = scmp.eq.s32.totalorder %s31, 0
      %p250 = por %p248, %p249
      %s252 = sadd.s32 %s251, 1
      %p255 = scmp.eq.s32.totalorder %s25, 1
      %p256 = scmp.ne.s32.totalorder %s251, %s253
      %p257 = scmp.eq.s32.totalorder %s25, 0
      %p258 = por %p256, %p257
      %p259 = scmp.ne.s32.totalorder %s251, %s253
      %p260 = scmp.eq.s32.totalorder %s30, 1
      %p261 = por %p259, %p260
      %p262 = scmp.ne.s32.totalorder %s253, %s254
      %p263 = scmp.eq.s32.totalorder %s30, 0
      %p264 = por %p262, %p263
      %p265 = scmp.ne.s32.totalorder %s253, %s254
      %p266 = scmp.eq.s32.totalorder %s31, 1
      %p267 = por %p265, %p266
      %p269 = scmp.ne.s32.totalorder %s254, %s268
      %p270 = scmp.eq.s32.totalorder %s31, 0
      %p271 = por %p269, %p270
      %s273 = sadd.s32 %s272, 1
      %p276 = scmp.eq.s32.totalorder %s25, 1
      %p277 = scmp.ne.s32.totalorder %s272, %s274
      %p278 = scmp.eq.s32.totalorder %s25, 0
      %p279 = por %p277, %p278
      %p280 = scmp.ne.s32.totalorder %s272, %s274
      %p281 = scmp.eq.s32.totalorder %s30, 1
      %p282 = por %p280, %p281
      %p283 = scmp.ne.s32.totalorder %s274, %s275
      %p284 = scmp.eq.s32.totalorder %s30, 0
      %p285 = por %p283, %p284
      %p286 = scmp.ne.s32.totalorder %s274, %s275
      %p287 = scmp.eq.s32.totalorder %s31, 1
      %p288 = por %p286, %p287
      %p290 = scmp.ne.s32.totalorder %s275, %s289
      %p291 = scmp.eq.s32.totalorder %s31, 0
      %p292 = por %p290, %p291
      %s293 = ssub.s32 %s32, %s44
      %s294 = ssub.s32 %s33, %s40
      %s295 = sor.u32 %s293, %s294
      %p296 = scmp.eq.s32.totalorder %s295, 0
      %s298 = sadd.s32 %s297, 1
      %s299 = scalar_select %p296, %s297, %s298
      %p302 = pneg %p296
      %p303 = scmp.eq.s32.totalorder %s25, 1
      %p304 = por %p302, %p303
      %p305 = scmp.ne.s32.totalorder %s297, %s300
      %p306 = scmp.eq.s32.totalorder %s25, 0
      %p307 = por %p305, %p306
      %p308 = scmp.ne.s32.totalorder %s297, %s300
      %p309 = scmp.eq.s32.totalorder %s30, 1
      %p310 = por %p308, %p309
      %p311 = scmp.ne.s32.totalorder %s300, %s301
      %p312 = scmp.eq.s32.totalorder %s30, 0
      %p313 = por %p311, %p312
      %p314 = scmp.ne.s32.totalorder %s300, %s301
      %p315 = scmp.eq.s32.totalorder %s31, 1
      %p316 = por %p314, %p315
      %p318 = scmp.ne.s32.totalorder %s301, %s317
      %p319 = scmp.eq.s32.totalorder %s31, 0
      %p320 = por %p318, %p319
      %p321 = scmp.le.s32.totalorder 1, %s25
      %p322 = scmp.lt.s32.totalorder %s25, 3
      %p323 = pnand %p321, %p322
      %p324 = pneg %p323
      // Predicated region
      $region9: #{tpu_custom_call.1} parent=5 // pred_check
        _
      $region10: #{tpu_custom_call.1} parent=5 // pred_check_branch
        %326 = sbr.rel (%p323) target = $region12
      $region11: #{tpu_custom_call.1} parent=5 // pred_region
        %s327 = ssub.s32 %s25, 1
        // Predicated region
        $region13: #{tpu_custom_call.1} parent=11 // pred_check
          %p328 = pneg %p138
        $region14: #{tpu_custom_call.1} parent=11 // pred_check_branch
          %330 = sbr.rel (%p328) target = $region16
        $region15: #{tpu_custom_call.1} parent=11 // pred_region
          %s332 = ssub.s32 256, 256
          %333 = vsyncadd [#allocation9], %s332
          %s334 = sshll.u32 [#allocation8], 4
          %s335 = int_to_ptr.vmem [resolvable:$true] %s334
          %340 = dma.hbm_to_vmem [thread:$0]  %s3, 256, %s335, [#allocation9], 64, 64, 4
        $region16: #{tpu_custom_call.1} parent=11 // pred_fallthru
          _
        // Predicated region
        $region17: #{tpu_custom_call.1} parent=11 // pred_check
          %p341 = pneg %p159
        $region18: #{tpu_custom_call.1} parent=11 // pred_check_branch
          %343 = sbr.rel (%p341) target = $region20
        $region19: #{tpu_custom_call.1} parent=11 // pred_region
          %s345 = ssub.s32 256, 256
          %346 = vsyncadd [#allocation9], %s345
          %s347 = sshll.u32 [#allocation10], 4
          %s348 = int_to_ptr.vmem [resolvable:$true] %s347
          %353 = dma.hbm_to_vmem [thread:$0]  %s4, 256, %s348, [#allocation9], 64, 64, 4
        $region20: #{tpu_custom_call.1} parent=11 // pred_fallthru
          _
        // Predicated region
        $region21: #{tpu_custom_call.1} parent=11 // pred_check
          %p354 = pneg %p180
        $region22: #{tpu_custom_call.1} parent=11 // pred_check_branch
          %356 = sbr.rel (%p354) target = $region24
        $region23: #{tpu_custom_call.1} parent=11 // pred_region
          %s358 = ssub.s32 256, 256
          %359 = vsyncadd [#allocation12], %s358
          %s360 = sshll.u32 [#allocation11], 4
          %s361 = int_to_ptr.vmem [resolvable:$true] %s360
          %366 = dma.hbm_to_vmem [thread:$0]  %s5, 256, %s361, [#allocation12], 64, 64, 4
        $region24: #{tpu_custom_call.1} parent=11 // pred_fallthru
          _
        // Predicated region
        $region25: #{tpu_custom_call.1} parent=11 // pred_check
          %p367 = pneg %p201
        $region26: #{tpu_custom_call.1} parent=11 // pred_check_branch
          %369 = sbr.rel (%p367) target = $region28
        $region27: #{tpu_custom_call.1} parent=11 // pred_region
          %s371 = ssub.s32 256, 256
          %372 = vsyncadd [#allocation12], %s371
          %s373 = sshll.u32 [#allocation13], 4
          %s374 = int_to_ptr.vmem [resolvable:$true] %s373
          %379 = dma.hbm_to_vmem [thread:$0]  %s6, 256, %s374, [#allocation12], 64, 64, 4
        $region28: #{tpu_custom_call.1} parent=11 // pred_fallthru
          _
        // Predicated region
        $region29: #{tpu_custom_call.1} parent=11 // pred_check
          %p380 = pneg %p222
        $region30: #{tpu_custom_call.1} parent=11 // pred_check_branch
          %382 = sbr.rel (%p380) target = $region32
        $region31: #{tpu_custom_call.1} parent=11 // pred_region
          _
        $region32: #{tpu_custom_call.1} parent=11 // pred_fallthru
          _
        // Predicated region
        $region33: #{tpu_custom_call.1} parent=11 // pred_check
          %p383 = pneg %p243
        $region34: #{tpu_custom_call.1} parent=11 // pred_check_branch
          %385 = sbr.rel (%p383) target = $region36
        $region35: #{tpu_custom_call.1} parent=11 // pred_region
          _
        $region36: #{tpu_custom_call.1} parent=11 // pred_fallthru
          _
        // Predicated region
        $region37: #{tpu_custom_call.1} parent=11 // pred_check
          %p386 = pneg %p264
        $region38: #{tpu_custom_call.1} parent=11 // pred_check_branch
          %388 = sbr.rel (%p386) target = $region40
        $region39: #{tpu_custom_call.1} parent=11 // pred_region
          _
        $region40: #{tpu_custom_call.1} parent=11 // pred_fallthru
          _
        // Predicated region
        $region41: #{tpu_custom_call.1} parent=11 // pred_check
          %p389 = pneg %p285
        $region42: #{tpu_custom_call.1} parent=11 // pred_check_branch
          %391 = sbr.rel (%p389) target = $region44
        $region43: #{tpu_custom_call.1} parent=11 // pred_region
          _
        $region44: #{tpu_custom_call.1} parent=11 // pred_fallthru
          _
      $region12: #{tpu_custom_call.1} parent=5 // pred_fallthru
        _
      %p392 = scmp.lt.s32.totalorder %s25, 2
      // Predicated region
      $region45: #{tpu_custom_call.1} parent=5 // pred_check
        %p393 = pneg %p392
      $region46: #{tpu_custom_call.1} parent=5 // pred_check_branch
        %395 = sbr.rel (%p393) target = $region48
      $region47: #{tpu_custom_call.1} parent=5 // pred_region
        // Predicated region
        $region49: #{tpu_custom_call.1} parent=47 // pred_check
          %p396 = pneg %p59
        $region50: #{tpu_custom_call.1} parent=47 // pred_check_branch
          %398 = sbr.rel (%p396) target = $region52
        $region51: #{tpu_custom_call.1} parent=47 // pred_region
          %p399 = scmp.lt.s32.totalorder %s32, 1
          %s400 = scalar_select %p399, %s32, 1
          %p401 = scmp.lt.s32.totalorder %s33, 0
          %s402 = scalar_select %p401, %s33, 0
          %s403 = smul.addr %s400, 4
          %s404 = sadd.s32 %s402, %s403
          %s405 = smul.addr %s404, 8
          %s406 = scalar_lea.vmem %s0, %s405
        $region52: #{tpu_custom_call.1} parent=47 // pred_fallthru
          _
        // Predicated region
        $region53: #{tpu_custom_call.1} parent=47 // pred_check
          %p407 = pneg %p85
        $region54: #{tpu_custom_call.1} parent=47 // pred_check_branch
          %409 = sbr.rel (%p407) target = $region56
        $region55: #{tpu_custom_call.1} parent=47 // pred_region
          %p410 = scmp.lt.s32.totalorder %s32, 1
          %s411 = scalar_select %p410, %s32, 1
          %s412 = smul.addr %s411, 4
          %s413 = smul.addr %s412, 8
          %s414 = scalar_lea.vmem %s1, %s413
        $region56: #{tpu_custom_call.1} parent=47 // pred_fallthru
          _
        // Predicated region
        $region57: #{tpu_custom_call.1} parent=47 // pred_check
          %p415 = pneg %p111
        $region58: #{tpu_custom_call.1} parent=47 // pred_check_branch
          %417 = sbr.rel (%p415) target = $region60
        $region59: #{tpu_custom_call.1} parent=47 // pred_region
          %s418 = sand.u32 %s101, 1
          %s419 = scalar_lea.sflag [#allocation6], %s418
          %s420 = sand.u32 %s101, 1
          %s421 = smul.addr %s420, 32
          %s422 = scalar_lea.vmem [#allocation5], %s421
          %s424 = ssub.s32 512, 512
          %425 = vsyncadd %s419, %s424
          %s426 = smul.addr %s32, 4
          %s427 = smul.addr %s426, 128
          %s428 = scalar_lea.hbm %s2, %s427
          %s429 = sshll.u32 %s422, 4
          %s430 = int_to_ptr.vmem [resolvable:$true] %s429
          %435 = dma.hbm_to_vmem [thread:$0]  %s428, 512, %s430, %s419, 128, 128, 8
        $region60: #{tpu_custom_call.1} parent=47 // pred_fallthru
          _
      $region48: #{tpu_custom_call.1} parent=5 // pred_fallthru
        _
      %p436 = scmp.le.s32.totalorder 1, %s25
      %p437 = scmp.lt.s32.totalorder %s25, 3
      %p438 = pnand %p436, %p437
      %p439 = pneg %p438
      // Predicated region
      $region61: #{tpu_custom_call.1} parent=5 // pred_check
        _
      $region62: #{tpu_custom_call.1} parent=5 // pred_check_branch
        %441 = sbr.rel (%p438) target = $region64
      $region63: #{tpu_custom_call.1} parent=5 // pred_region
        %s442 = ssub.s32 %s25, 1
        %s443 = sand.u32 %s104, 1
        %s444 = scalar_lea.sflag [#allocation6], %s443
        %s445 = sand.u32 %s104, 1
        %s446 = smul.addr %s445, 32
        %s447 = scalar_lea.vmem [#allocation5], %s446
        // Predicated region
        $region65: #{tpu_custom_call.1} parent=63 // pred_check
          %p448 = pneg %p117
        $region66: #{tpu_custom_call.1} parent=63 // pred_check_branch
          %450 = sbr.rel (%p448) target = $region68
        $region67: #{tpu_custom_call.1} parent=63 // pred_region
          %451 = dma.done %s444, 512
        $region68: #{tpu_custom_call.1} parent=63 // pred_fallthru
          _
        // Predicated region
        $region69: #{tpu_custom_call.1} parent=63 // pred_check
          %p452 = pneg %p138
        $region70: #{tpu_custom_call.1} parent=63 // pred_check_branch
          %454 = sbr.rel (%p452) target = $region72
        $region71: #{tpu_custom_call.1} parent=63 // pred_region
          %455 = dma.done [#allocation9], 256
        $region72: #{tpu_custom_call.1} parent=63 // pred_fallthru
          _
        // Predicated region
        $region73: #{tpu_custom_call.1} parent=63 // pred_check
          %p456 = pneg %p159
        $region74: #{tpu_custom_call.1} parent=63 // pred_check_branch
          %458 = sbr.rel (%p456) target = $region76
        $region75: #{tpu_custom_call.1} parent=63 // pred_region
          %459 = dma.done [#allocation9], 256
        $region76: #{tpu_custom_call.1} parent=63 // pred_fallthru
          _
        // Predicated region
        $region77: #{tpu_custom_call.1} parent=63 // pred_check
          %p460 = pneg %p180
        $region78: #{tpu_custom_call.1} parent=63 // pred_check_branch
          %462 = sbr.rel (%p460) target = $region80
        $region79: #{tpu_custom_call.1} parent=63 // pred_region
          %463 = dma.done [#allocation12], 256
        $region80: #{tpu_custom_call.1} parent=63 // pred_fallthru
          _
        // Predicated region
        $region81: #{tpu_custom_call.1} parent=63 // pred_check
          %p464 = pneg %p201
        $region82: #{tpu_custom_call.1} parent=63 // pred_check_branch
          %466 = sbr.rel (%p464) target = $region84
        $region83: #{tpu_custom_call.1} parent=63 // pred_region
          %467 = dma.done [#allocation12], 256
        $region84: #{tpu_custom_call.1} parent=63 // pred_fallthru
          _
        %p468 = scmp.lt.s32.totalorder %s34, 1
        %s469 = scalar_select %p468, %s34, 1
        %p470 = scmp.lt.s32.totalorder %s35, 0
        %s471 = scalar_select %p470, %s35, 0
        %s472 = smul.addr %s469, 4
        %s473 = sadd.s32 %s471, %s472
        %s474 = smul.addr %s473, 8
        %s475 = scalar_lea.vmem %s0, %s474
        %p476 = pneg %p65
        %p477 = pneg %p62
        %p478 = scmp.lt.s32.totalorder %s34, 1
        %s479 = scalar_select %p478, %s34, 1
        %s480 = smul.addr %s479, 4
        %s481 = smul.addr %s480, 8
        %s482 = scalar_lea.vmem %s1, %s481
        %p483 = pneg %p91
        %p484 = pneg %p88
        %s485 = sand.u32 %s104, 1
        %s486 = scalar_lea.sflag [#allocation6], %s485
        %s487 = sand.u32 %s104, 1
        %s488 = smul.addr %s487, 32
        %s489 = scalar_lea.vmem [#allocation5], %s488
        %p490 = pneg %p117
        %p491 = pneg %p114
        %p492 = pneg %p138
        %p493 = pneg %p135
        %p494 = pneg %p159
        %p495 = pneg %p156
        %p496 = pneg %p180
        %p497 = pneg %p177
        %p498 = pneg %p201
        %p499 = pneg %p198
        %p500 = pneg %p222
        %p501 = pneg %p219
        %p502 = pneg %p243
        %p503 = pneg %p240
        %p504 = pneg %p264
        %p505 = pneg %p261
        %p506 = pneg %p285
        %p507 = pneg %p282
        %p508 = pneg %p313
        %p509 = pneg %p310
        %s510 = sand.u32 %s300, 1
        %s511 = scalar_lea.sflag [#allocation7], %s510
        %s512 = sand.u32 %s300, 1
        %s513 = smul.addr %s512, 32
        %s514 = scalar_lea.vmem [#allocation14], %s513
        %p515 = scmp.lt.s32.totalorder %s34, 1
        %s516 = scalar_select %p515, %s34, 1
        %p517 = scmp.lt.s32.totalorder %s35, 0
        %s518 = scalar_select %p517, %s35, 0
        %s519 = smul.addr %s516, 4
        %s520 = sadd.s32 %s518, %s519
        %s521 = smul.addr %s520, 8
        %s522 = scalar_lea.vmem %s0, %s521
        %p523 = scmp.lt.s32.totalorder %s34, 1
        %s524 = scalar_select %p523, %s34, 1
        %s525 = smul.addr %s524, 4
        %s526 = smul.addr %s525, 8
        %s527 = scalar_lea.vmem %s1, %s526
        %p529 = scmp.eq.s32.totalorder %s35, 0
        // Predicated region
        $region85: #{tpu_custom_call.1} parent=63 // pred_check
          %p530 = pneg %p529
        $region86: #{tpu_custom_call.1} parent=63 // pred_check_branch
          %532 = sbr.rel (%p530) target = $region88
        $region87: #{tpu_custom_call.1} parent=63 // pred_region
          %v533 = vld [vmem:[%s527] sm:$0xff]
          %v534 = vld [vmem:[%s527 + $0x8] sm:$0xff]
          %v535 = vld [vmem:[%s527 + $0x10] sm:$0xff]
          %v536 = vld [vmem:[%s527 + $0x18] sm:$0xff]
          %v537 = vpack.c.bf16 %v534, %v533
          %v538 = vpack.c.bf16 %v536, %v535
          %v539 = vld [vmem:[%s447] sm:$0xff]
          %v540 = vld [vmem:[%s447 + $0x8] sm:$0xff]
          %v541 = vld [vmem:[%s447 + $0x10] sm:$0xff]
          %v542 = vld [vmem:[%s447 + $0x18] sm:$0xff]
          %v543 = vpack.c.bf16 %v540, %v539
          %v544 = vpack.c.bf16 %v542, %v541
          %v545 = vld [vmem:[#allocation10] sm:$0xf]
          %v546 = vld [vmem:[#allocation10 + $0x4] sm:$0xf]
          %v547 = vld [vmem:[#allocation10 + $0x8] sm:$0xf]
          %v548 = vld [vmem:[#allocation10 + $0xc] sm:$0xf]
          %v549 = vld [vmem:[%s8] sm:$0xff]
          %v550 = vld [vmem:[%s8 + $0x8] sm:$0xff]
          %v551 = vld [vmem:[%s8 + $0x10] sm:$0xff]
          %v552 = vld [vmem:[%s8 + $0x18] sm:$0xff]
          %554 = vset.pattern.permute.xlu0 0
          %555 = vperm.xlu0 %554, %v549
          %v556 = vpop.permute.xlu0 %555
          %559 = vset.pattern.permute.xlu0 0
          %560 = vperm.xlu0 %559, %v550
          %v561 = vpop.permute.xlu0 %560
          %564 = vset.pattern.permute.xlu0 0
          %565 = vperm.xlu0 %564, %v551
          %v566 = vpop.permute.xlu0 %565
          %569 = vset.pattern.permute.xlu0 0
          %570 = vperm.xlu0 %569, %v552
          %v571 = vpop.permute.xlu0 %570
          %v577 = vunpack.c.l.b16 %v545
          %v578 = vunpack.c.l.b16 %v546
          %v579 = vunpack.c.l.b16 %v547
          %v580 = vunpack.c.l.b16 %v548
          %v581 = vpack.c.b16 %v578, %v577
          %v582 = vpack.c.b16 %v580, %v579
          %vm583 = vcmask 261120
          %v585 = vsel %vm583, %v581, 0
          %v588 = vsel %vm583, %v582, 0
          %590 = vmatprep.subr.bf16.mxu0 0
          %591 = vmatpush1.bf16.msra.mxu0 0
          %592 = vmatprep.subr.bf16.mxu0 0
          %593 = vmatpush1.bf16.msra.mxu0 0
          %594 = vmatprep.subr.bf16.mxu0 0
          %595 = vmatpush1.bf16.msra.mxu0 0
          %596 = vmatprep.subr.bf16.mxu0 0
          %597 = vmatpush1.bf16.msra.mxu0 0
          %598 = vmatprep.subr.bf16.mxu0 0
          %599 = vmatpush1.bf16.msra.mxu0 0
          %600 = vmatprep.subr.bf16.mxu0 0
          %601 = vmatpush1.bf16.msra.mxu0 0
          %602 = vmatprep.subr.bf16.mxu0 0
          %603 = vmatpush1.bf16.msra.mxu0 %v538
          %604 = vmatprep.subr.bf16.mxu0 0
          %605 = vmatpush1.bf16.msra.mxu0 %v537
          %606 = vmatprep.subr.bf16.mxu0 0
          %607 = vmatpush2.bf16.msra.mxu0 0
          %608 = vmatprep.subr.bf16.mxu0 0
          %609 = vmatpush2.bf16.msra.mxu0 0
          %610 = vmatprep.subr.bf16.mxu0 0
          %611 = vmatpush2.bf16.msra.mxu0 0
          %612 = vmatprep.subr.bf16.mxu0 0
          %613 = vmatpush2.bf16.msra.mxu0 0
          %614 = vmatprep.subr.bf16.mxu0 0
          %615 = vmatpush2.bf16.msra.mxu0 0
          %616 = vmatprep.subr.bf16.mxu0 0
          %617 = vmatpush2.bf16.msra.mxu0 0
          %618 = vmatprep.subr.bf16.mxu0 0
          %619 = vmatpush2.bf16.msra.mxu0 0
          %620 = vmatprep.subr.bf16.mxu0 0
          %621 = vmatpush2.bf16.msra.mxu0 0
          %622 = vmatprep.mubr.bf16.mxu0 0
          %623 = vmatmul.mubr.bf16.gmra.mxu0 %v585
          %v624 = vpop.f32.mrf.mxu0
          %v625 = vadd.f32 %v556, %v624
          %v626 = vpop.f32.mrf.mxu0
          %v627 = vpop.f32.mrf.mxu0
          %v628 = vadd.f32 %v561, %v627
          %v629 = vpop.f32.mrf.mxu0
          %630 = vmatprep.mubr.bf16.mxu0 0
          %631 = vmatmul.mubr.bf16.gmra.mxu0 %v588
          %v632 = vpop.f32.mrf.mxu0
          %v633 = vadd.f32 %v566, %v632
          %v634 = vpop.f32.mrf.mxu0
          %v635 = vpop.f32.mrf.mxu0
          %v636 = vadd.f32 %v571, %v635
          %v637 = vpop.f32.mrf.mxu0
          %638 = vdwg.mxu0
          %v639 = vpack.c.bf16 %v628, %v625
          %v640 = vpack.c.bf16 %v636, %v633
          %v643 = vunpack.c.l.b16 %v639
          %v644 = vunpack.c.h.b16 %v639
          %v645 = vunpack.c.l.b16 %v640
          %v646 = vunpack.c.h.b16 %v640
          %v647 = vpack.c.b16 %v643, %v643
          %v648 = vpack.c.b16 %v644, %v644
          %v649 = vpack.c.b16 %v645, %v645
          %v650 = vpack.c.b16 %v646, %v646
          %655 = vst [vmem:[#allocation2] sm:$0xf] %v647
          %656 = vst [vmem:[#allocation2 + $0x4] sm:$0xf] %v648
          %657 = vst [vmem:[#allocation2 + $0x8] sm:$0xf] %v649
          %658 = vst [vmem:[#allocation2 + $0xc] sm:$0xf] %v650
          %v659 = vld [vmem:[#allocation11] sm:$0xf]
          %v660 = vld [vmem:[#allocation11 + $0x4] sm:$0xf]
          %v661 = vld [vmem:[#allocation11 + $0x8] sm:$0xf]
          %v662 = vld [vmem:[#allocation11 + $0xc] sm:$0xf]
          %v663 = vld [vmem:[%s9] sm:$0xff]
          %v664 = vld [vmem:[%s9 + $0x8] sm:$0xff]
          %v665 = vld [vmem:[%s9 + $0x10] sm:$0xff]
          %v666 = vld [vmem:[%s9 + $0x18] sm:$0xff]
          %668 = vset.pattern.permute.xlu0 0
          %669 = vperm.xlu0 %668, %v663
          %v670 = vpop.permute.xlu0 %669
          %673 = vset.pattern.permute.xlu0 0
          %674 = vperm.xlu0 %673, %v664
          %v675 = vpop.permute.xlu0 %674
          %678 = vset.pattern.permute.xlu0 0
          %679 = vperm.xlu0 %678, %v665
          %v680 = vpop.permute.xlu0 %679
          %683 = vset.pattern.permute.xlu0 0
          %684 = vperm.xlu0 %683, %v666
          %v685 = vpop.permute.xlu0 %684
          %v691 = vunpack.c.l.b16 %v659
          %v692 = vunpack.c.l.b16 %v660
          %v693 = vunpack.c.l.b16 %v661
          %v694 = vunpack.c.l.b16 %v662
          %v695 = vpack.c.b16 %v692, %v691
          %v696 = vpack.c.b16 %v694, %v693
          %v698 = vsel %vm583, %v695, 0
          %v701 = vsel %vm583, %v696, 0
          %703 = vmatprep.subr.bf16.mxu0 0
          %704 = vmatpush1.bf16.msra.mxu0 0
          %705 = vmatprep.subr.bf16.mxu0 0
          %706 = vmatpush1.bf16.msra.mxu0 0
          %707 = vmatprep.subr.bf16.mxu0 0
          %708 = vmatpush1.bf16.msra.mxu0 0
          %709 = vmatprep.subr.bf16.mxu0 0
          %710 = vmatpush1.bf16.msra.mxu0 0
          %711 = vmatprep.subr.bf16.mxu0 0
          %712 = vmatpush1.bf16.msra.mxu0 0
          %713 = vmatprep.subr.bf16.mxu0 0
          %714 = vmatpush1.bf16.msra.mxu0 0
          %715 = vmatprep.subr.bf16.mxu0 0
          %716 = vmatpush1.bf16.msra.mxu0 %v544
          %717 = vmatprep.subr.bf16.mxu0 0
          %718 = vmatpush1.bf16.msra.mxu0 %v543
          %719 = vmatprep.subr.bf16.mxu0 0
          %720 = vmatpush2.bf16.msra.mxu0 0
          %721 = vmatprep.subr.bf16.mxu0 0
          %722 = vmatpush2.bf16.msra.mxu0 0
          %723 = vmatprep.subr.bf16.mxu0 0
          %724 = vmatpush2.bf16.msra.mxu0 0
          %725 = vmatprep.subr.bf16.mxu0 0
          %726 = vmatpush2.bf16.msra.mxu0 0
          %727 = vmatprep.subr.bf16.mxu0 0
          %728 = vmatpush2.bf16.msra.mxu0 0
          %729 = vmatprep.subr.bf16.mxu0 0
          %730 = vmatpush2.bf16.msra.mxu0 0
          %731 = vmatprep.subr.bf16.mxu0 0
          %732 = vmatpush2.bf16.msra.mxu0 0
          %733 = vmatprep.subr.bf16.mxu0 0
          %734 = vmatpush2.bf16.msra.mxu0 0
          %735 = vmatprep.mubr.bf16.mxu0 0
          %736 = vmatmul.mubr.bf16.gmra.mxu0 %v698
          %v737 = vpop.f32.mrf.mxu0
          %v738 = vadd.f32 %v670, %v737
          %v739 = vpop.f32.mrf.mxu0
          %v740 = vpop.f32.mrf.mxu0
          %v741 = vadd.f32 %v675, %v740
          %v742 = vpop.f32.mrf.mxu0
          %743 = vmatprep.mubr.bf16.mxu0 0
          %744 = vmatmul.mubr.bf16.gmra.mxu0 %v701
          %v745 = vpop.f32.mrf.mxu0
          %v746 = vadd.f32 %v680, %v745
          %v747 = vpop.f32.mrf.mxu0
          %v748 = vpop.f32.mrf.mxu0
          %v749 = vadd.f32 %v685, %v748
          %v750 = vpop.f32.mrf.mxu0
          %751 = vdwg.mxu0
          %v752 = vpack.c.bf16 %v741, %v738
          %v753 = vpack.c.bf16 %v749, %v746
          %v756 = vunpack.c.l.b16 %v752
          %v757 = vunpack.c.h.b16 %v752
          %v758 = vunpack.c.l.b16 %v753
          %v759 = vunpack.c.h.b16 %v753
          %v760 = vpack.c.b16 %v756, %v756
          %v761 = vpack.c.b16 %v757, %v757
          %v762 = vpack.c.b16 %v758, %v758
          %v763 = vpack.c.b16 %v759, %v759
          %768 = vst [vmem:[#allocation3] sm:$0xf] %v760
          %769 = vst [vmem:[#allocation3 + $0x4] sm:$0xf] %v761
          %770 = vst [vmem:[#allocation3 + $0x8] sm:$0xf] %v762
          %771 = vst [vmem:[#allocation3 + $0xc] sm:$0xf] %v763
        $region88: #{tpu_custom_call.1} parent=63 // pred_fallthru
          _
        %v772 = vld [vmem:[%s522] sm:$0xff]
        %v773 = vld [vmem:[%s522 + $0x8] sm:$0xff]
        %v774 = vld [vmem:[%s522 + $0x10] sm:$0xff]
        %v775 = vld [vmem:[%s522 + $0x18] sm:$0xff]
        %v776 = vpack.c.bf16 %v773, %v772
        %v777 = vpack.c.bf16 %v775, %v774
        %v778 = vld [vmem:[#allocation8] sm:$0xf]
        %v779 = vld [vmem:[#allocation8 + $0x4] sm:$0xf]
        %v780 = vld [vmem:[#allocation8 + $0x8] sm:$0xf]
        %v781 = vld [vmem:[#allocation8 + $0xc] sm:$0xf]
        %v782 = vld [vmem:[%s7] sm:$0xff]
        %v783 = vld [vmem:[%s7 + $0x8] sm:$0xff]
        %v784 = vld [vmem:[%s7 + $0x10] sm:$0xff]
        %v785 = vld [vmem:[%s7 + $0x18] sm:$0xff]
        %787 = vset.pattern.permute.xlu0 0
        %788 = vperm.xlu0 %787, %v782
        %v789 = vpop.permute.xlu0 %788
        %792 = vset.pattern.permute.xlu0 0
        %793 = vperm.xlu0 %792, %v783
        %v794 = vpop.permute.xlu0 %793
        %797 = vset.pattern.permute.xlu0 0
        %798 = vperm.xlu0 %797, %v784
        %v799 = vpop.permute.xlu0 %798
        %802 = vset.pattern.permute.xlu0 0
        %803 = vperm.xlu0 %802, %v785
        %v804 = vpop.permute.xlu0 %803
        %v810 = vunpack.c.l.b16 %v778
        %v811 = vunpack.c.l.b16 %v779
        %v812 = vunpack.c.l.b16 %v780
        %v813 = vunpack.c.l.b16 %v781
        %v814 = vpack.c.b16 %v811, %v810
        %v815 = vpack.c.b16 %v813, %v812
        %vm816 = vcmask 261120
        %v818 = vsel %vm816, %v814, 0
        %v821 = vsel %vm816, %v815, 0
        %823 = vmatprep.subr.bf16.mxu0 0
        %824 = vmatpush1.bf16.msra.mxu0 0
        %825 = vmatprep.subr.bf16.mxu0 0
        %826 = vmatpush1.bf16.msra.mxu0 0
        %827 = vmatprep.subr.bf16.mxu0 0
        %828 = vmatpush1.bf16.msra.mxu0 0
        %829 = vmatprep.subr.bf16.mxu0 0
        %830 = vmatpush1.bf16.msra.mxu0 0
        %831 = vmatprep.subr.bf16.mxu0 0
        %832 = vmatpush1.bf16.msra.mxu0 0
        %833 = vmatprep.subr.bf16.mxu0 0
        %834 = vmatpush1.bf16.msra.mxu0 0
        %835 = vmatprep.subr.bf16.mxu0 0
        %836 = vmatpush1.bf16.msra.mxu0 %v777
        %837 = vmatprep.subr.bf16.mxu0 0
        %838 = vmatpush1.bf16.msra.mxu0 %v776
        %839 = vmatprep.subr.bf16.mxu0 0
        %840 = vmatpush2.bf16.msra.mxu0 0
        %841 = vmatprep.subr.bf16.mxu0 0
        %842 = vmatpush2.bf16.msra.mxu0 0
        %843 = vmatprep.subr.bf16.mxu0 0
        %844 = vmatpush2.bf16.msra.mxu0 0
        %845 = vmatprep.subr.bf16.mxu0 0
        %846 = vmatpush2.bf16.msra.mxu0 0
        %847 = vmatprep.subr.bf16.mxu0 0
        %848 = vmatpush2.bf16.msra.mxu0 0
        %849 = vmatprep.subr.bf16.mxu0 0
        %850 = vmatpush2.bf16.msra.mxu0 0
        %851 = vmatprep.subr.bf16.mxu0 0
        %852 = vmatpush2.bf16.msra.mxu0 0
        %853 = vmatprep.subr.bf16.mxu0 0
        %854 = vmatpush2.bf16.msra.mxu0 0
        %855 = vmatprep.mubr.bf16.mxu0 0
        %856 = vmatmul.mubr.bf16.gmra.mxu0 %v818
        %v857 = vpop.f32.mrf.mxu0
        %v858 = vadd.f32 %v789, %v857
        %v859 = vpop.f32.mrf.mxu0
        %v860 = vpop.f32.mrf.mxu0
        %v861 = vadd.f32 %v794, %v860
        %v862 = vpop.f32.mrf.mxu0
        %863 = vmatprep.mubr.bf16.mxu0 0
        %864 = vmatmul.mubr.bf16.gmra.mxu0 %v821
        %v865 = vpop.f32.mrf.mxu0
        %v866 = vadd.f32 %v799, %v865
        %v867 = vpop.f32.mrf.mxu0
        %v868 = vpop.f32.mrf.mxu0
        %v869 = vadd.f32 %v804, %v868
        %v870 = vpop.f32.mrf.mxu0
        %871 = vdwg.mxu0
        %v872 = vpack.c.bf16 %v861, %v858
        %v873 = vpack.c.bf16 %v869, %v866
        %v874 = vld [vmem:[#allocation2] sm:$0xf]
        %v875 = vld [vmem:[#allocation2 + $0x4] sm:$0xf]
        %v876 = vld [vmem:[#allocation2 + $0x8] sm:$0xf]
        %v877 = vld [vmem:[#allocation2 + $0xc] sm:$0xf]
        %v878 = vld [vmem:[#allocation3] sm:$0xf]
        %v879 = vld [vmem:[#allocation3 + $0x4] sm:$0xf]
        %v880 = vld [vmem:[#allocation3 + $0x8] sm:$0xf]
        %v881 = vld [vmem:[#allocation3 + $0xc] sm:$0xf]
        %v882 = vlaneseq
        %v883 = vand.u32 %v882, 127
        %vm884 = vcmp.lt.s32.totalorder %v883, 16
        %v885 = vsel %vm884, 0.0, -1e+30
        %886 = vxpose.xlu0.c.b16.start [1/8] %v872, 128
        %887 = vxpose.xlu0.c.b16.cont [2/8] 0, 128
        %888 = vxpose.xlu0.c.b16.cont [3/8] 0, 128
        %889 = vxpose.xlu0.c.b16.cont [4/8] 0, 128
        %890 = vxpose.xlu0.c.b16.cont [5/8] 0, 128
        %891 = vxpose.xlu0.c.b16.cont [6/8] 0, 128
        %892 = vxpose.xlu0.c.b16.cont [7/8] 0, 128
        %893 = vxpose.xlu0.c.b16.end [8/8] 0, 128
        %v894 = vpop.trf.xlu0
        %v895 = vpop.trf.xlu0
        %v896 = vpop.trf.xlu0
        %v897 = vpop.trf.xlu0
        %v898 = vpop.trf.xlu0
        %v899 = vpop.trf.xlu0
        %v900 = vpop.trf.xlu0
        %v901 = vpop.trf.xlu0
        %vm902 = vcmask 64512
        %v904 = vsel %vm902, %v894, 0
        %v907 = vsel %vm902, %v895, 0
        %v910 = vsel %vm902, %v896, 0
        %v913 = vsel %vm902, %v897, 0
        %v916 = vsel %vm902, %v898, 0
        %v919 = vsel %vm902, %v899, 0
        %v922 = vsel %vm902, %v900, 0
        %v925 = vsel %vm902, %v901, 0
        %vm927 = vcmask 1043456
        %v929 = vsel %vm927, %v874, 0
        %931 = vmatprep.subr.bf16.mxu0 0
        %932 = vmatpush1.bf16.msra.mxu0 0
        %933 = vmatprep.subr.bf16.mxu0 0
        %934 = vmatpush1.bf16.msra.mxu0 0
        %935 = vmatprep.subr.bf16.mxu0 0
        %936 = vmatpush1.bf16.msra.mxu0 0
        %937 = vmatprep.subr.bf16.mxu0 0
        %938 = vmatpush1.bf16.msra.mxu0 0
        %939 = vmatprep.subr.bf16.mxu0 0
        %940 = vmatpush1.bf16.msra.mxu0 0
        %941 = vmatprep.subr.bf16.mxu0 0
        %942 = vmatpush1.bf16.msra.mxu0 0
        %943 = vmatprep.subr.bf16.mxu0 0
        %944 = vmatpush1.bf16.msra.mxu0 0
        %945 = vmatprep.subr.bf16.mxu0 0
        %946 = vmatpush1.bf16.msra.mxu0 %v929
        %947 = vmatprep.subr.bf16.mxu0 0
        %948 = vmatpush2.bf16.msra.mxu0 0
        %949 = vmatprep.subr.bf16.mxu0 0
        %950 = vmatpush2.bf16.msra.mxu0 0
        %951 = vmatprep.subr.bf16.mxu0 0
        %952 = vmatpush2.bf16.msra.mxu0 0
        %953 = vmatprep.subr.bf16.mxu0 0
        %954 = vmatpush2.bf16.msra.mxu0 0
        %955 = vmatprep.subr.bf16.mxu0 0
        %956 = vmatpush2.bf16.msra.mxu0 0
        %957 = vmatprep.subr.bf16.mxu0 0
        %958 = vmatpush2.bf16.msra.mxu0 0
        %959 = vmatprep.subr.bf16.mxu0 0
        %960 = vmatpush2.bf16.msra.mxu0 0
        %961 = vmatprep.subr.bf16.mxu0 0
        %962 = vmatpush2.bf16.msra.mxu0 0
        %963 = vmatprep.mubr.bf16.mxu0 0
        %964 = vmatmul.mubr.bf16.gmra.mxu0 %v904
        %v965 = vpop.f32.mrf.mxu0
        %v966 = vadd.f32 %v885, %v965
        %v967 = vpop.f32.mrf.mxu0
        %v968 = vpop.f32.mrf.mxu0
        %v969 = vadd.f32 %v885, %v968
        %v970 = vpop.f32.mrf.mxu0
        %971 = vmatprep.mubr.bf16.mxu0 0
        %972 = vmatmul.mubr.bf16.gmra.mxu0 %v907
        %v973 = vpop.f32.mrf.mxu0
        %v974 = vadd.f32 %v885, %v973
        %v975 = vpop.f32.mrf.mxu0
        %v976 = vpop.f32.mrf.mxu0
        %v977 = vadd.f32 %v885, %v976
        %v978 = vpop.f32.mrf.mxu0
        %979 = vmatprep.mubr.bf16.mxu0 0
        %980 = vmatmul.mubr.bf16.gmra.mxu0 %v910
        %v981 = vpop.f32.mrf.mxu0
        %v982 = vadd.f32 %v885, %v981
        %v983 = vpop.f32.mrf.mxu0
        %v984 = vpop.f32.mrf.mxu0
        %v985 = vadd.f32 %v885, %v984
        %v986 = vpop.f32.mrf.mxu0
        %987 = vmatprep.mubr.bf16.mxu0 0
        %988 = vmatmul.mubr.bf16.gmra.mxu0 %v913
        %v989 = vpop.f32.mrf.mxu0
        %v990 = vadd.f32 %v885, %v989
        %v991 = vpop.f32.mrf.mxu0
        %v992 = vpop.f32.mrf.mxu0
        %v993 = vadd.f32 %v885, %v992
        %v994 = vpop.f32.mrf.mxu0
        %995 = vmatprep.mubr.bf16.mxu0 0
        %996 = vmatmul.mubr.bf16.gmra.mxu0 %v916
        %v997 = vpop.f32.mrf.mxu0
        %v998 = vadd.f32 %v885, %v997
        %v999 = vpop.f32.mrf.mxu0
        %v1000 = vpop.f32.mrf.mxu0
        %v1001 = vadd.f32 %v885, %v1000
        %v1002 = vpop.f32.mrf.mxu0
        %1003 = vmatprep.mubr.bf16.mxu0 0
        %1004 = vmatmul.mubr.bf16.gmra.mxu0 %v919
        %v1005 = vpop.f32.mrf.mxu0
        %v1006 = vadd.f32 %v885, %v1005
        %v1007 = vpop.f32.mrf.mxu0
        %v1008 = vpop.f32.mrf.mxu0
        %v1009 = vadd.f32 %v885, %v1008
        %v1010 = vpop.f32.mrf.mxu0
        %1011 = vmatprep.mubr.bf16.mxu0 0
        %1012 = vmatmul.mubr.bf16.gmra.mxu0 %v922
        %v1013 = vpop.f32.mrf.mxu0
        %v1014 = vadd.f32 %v885, %v1013
        %v1015 = vpop.f32.mrf.mxu0
        %v1016 = vpop.f32.mrf.mxu0
        %v1017 = vadd.f32 %v885, %v1016
        %v1018 = vpop.f32.mrf.mxu0
        %1019 = vmatprep.mubr.bf16.mxu0 0
        %1020 = vmatmul.mubr.bf16.gmra.mxu0 %v925
        %v1021 = vpop.f32.mrf.mxu0
        %v1022 = vadd.f32 %v885, %v1021
        %v1023 = vpop.f32.mrf.mxu0
        %v1024 = vpop.f32.mrf.mxu0
        %v1025 = vadd.f32 %v885, %v1024
        %v1026 = vpop.f32.mrf.mxu0
        %1027 = vdwg.mxu0
        %1028 = vmax.xlane.f32.xlu0 %v966
        %v1029 = vpop.xlane.xlu0 %1028
        %1030 = vmax.xlane.f32.xlu0 %v969
        %v1031 = vpop.xlane.xlu0 %1030
        %1032 = vmax.xlane.f32.xlu0 %v974
        %v1033 = vpop.xlane.xlu0 %1032
        %1034 = vmax.xlane.f32.xlu0 %v977
        %v1035 = vpop.xlane.xlu0 %1034
        %1036 = vmax.xlane.f32.xlu0 %v982
        %v1037 = vpop.xlane.xlu0 %1036
        %1038 = vmax.xlane.f32.xlu0 %v985
        %v1039 = vpop.xlane.xlu0 %1038
        %1040 = vmax.xlane.f32.xlu0 %v990
        %v1041 = vpop.xlane.xlu0 %1040
        %1042 = vmax.xlane.f32.xlu0 %v993
        %v1043 = vpop.xlane.xlu0 %1042
        %1044 = vmax.xlane.f32.xlu0 %v998
        %v1045 = vpop.xlane.xlu0 %1044
        %1046 = vmax.xlane.f32.xlu0 %v1001
        %v1047 = vpop.xlane.xlu0 %1046
        %1048 = vmax.xlane.f32.xlu0 %v1006
        %v1049 = vpop.xlane.xlu0 %1048
        %1050 = vmax.xlane.f32.xlu0 %v1009
        %v1051 = vpop.xlane.xlu0 %1050
        %1052 = vmax.xlane.f32.xlu0 %v1014
        %v1053 = vpop.xlane.xlu0 %1052
        %1054 = vmax.xlane.f32.xlu0 %v1017
        %v1055 = vpop.xlane.xlu0 %1054
        %1056 = vmax.xlane.f32.xlu0 %v1022
        %v1057 = vpop.xlane.xlu0 %1056
        %1058 = vmax.xlane.f32.xlu0 %v1025
        %v1059 = vpop.xlane.xlu0 %1058
        %v1060 = vsub.f32 %v966, %v1029
        %v1061 = vsub.f32 %v969, %v1031
        %v1062 = vsub.f32 %v974, %v1033
        %v1063 = vsub.f32 %v977, %v1035
        %v1064 = vsub.f32 %v982, %v1037
        %v1065 = vsub.f32 %v985, %v1039
        %v1066 = vsub.f32 %v990, %v1041
        %v1067 = vsub.f32 %v993, %v1043
        %v1068 = vsub.f32 %v998, %v1045
        %v1069 = vsub.f32 %v1001, %v1047
        %v1070 = vsub.f32 %v1006, %v1049
        %v1071 = vsub.f32 %v1009, %v1051
        %v1072 = vsub.f32 %v1014, %v1053
        %v1073 = vsub.f32 %v1017, %v1055
        %v1074 = vsub.f32 %v1022, %v1057
        %v1075 = vsub.f32 %v1025, %v1059
        %v1076 = vmul.f32 %v1060, 1.442695
        %v1077 = vpow.pop %v1076
        %v1078 = vmul.f32 %v1061, 1.442695
        %v1079 = vpow.pop %v1078
        %v1080 = vmul.f32 %v1062, 1.442695
        %v1081 = vpow.pop %v1080
        %v1082 = vmul.f32 %v1063, 1.442695
        %v1083 = vpow.pop %v1082
        %v1084 = vmul.f32 %v1064, 1.442695
        %v1085 = vpow.pop %v1084
        %v1086 = vmul.f32 %v1065, 1.442695
        %v1087 = vpow.pop %v1086
        %v1088 = vmul.f32 %v1066, 1.442695
        %v1089 = vpow.pop %v1088
        %v1090 = vmul.f32 %v1067, 1.442695
        %v1091 = vpow.pop %v1090
        %v1092 = vmul.f32 %v1068, 1.442695
        %v1093 = vpow.pop %v1092
        %v1094 = vmul.f32 %v1069, 1.442695
        %v1095 = vpow.pop %v1094
        %v1096 = vmul.f32 %v1070, 1.442695
        %v1097 = vpow.pop %v1096
        %v1098 = vmul.f32 %v1071, 1.442695
        %v1099 = vpow.pop %v1098
        %v1100 = vmul.f32 %v1072, 1.442695
        %v1101 = vpow.pop %v1100
        %v1102 = vmul.f32 %v1073, 1.442695
        %v1103 = vpow.pop %v1102
        %v1104 = vmul.f32 %v1074, 1.442695
        %v1105 = vpow.pop %v1104
        %v1106 = vmul.f32 %v1075, 1.442695
        %v1107 = vpow.pop %v1106
        %1108 = vadd.xlane.f32.xlu0 %v1077
        %v1109 = vpop.xlane.xlu0 %1108
        %1110 = vadd.xlane.f32.xlu0 %v1079
        %v1111 = vpop.xlane.xlu0 %1110
        %1112 = vadd.xlane.f32.xlu0 %v1081
        %v1113 = vpop.xlane.xlu0 %1112
        %1114 = vadd.xlane.f32.xlu0 %v1083
        %v1115 = vpop.xlane.xlu0 %1114
        %1116 = vadd.xlane.f32.xlu0 %v1085
        %v1117 = vpop.xlane.xlu0 %1116
        %1118 = vadd.xlane.f32.xlu0 %v1087
        %v1119 = vpop.xlane.xlu0 %1118
        %1120 = vadd.xlane.f32.xlu0 %v1089
        %v1121 = vpop.xlane.xlu0 %1120
        %1122 = vadd.xlane.f32.xlu0 %v1091
        %v1123 = vpop.xlane.xlu0 %1122
        %1124 = vadd.xlane.f32.xlu0 %v1093
        %v1125 = vpop.xlane.xlu0 %1124
        %1126 = vadd.xlane.f32.xlu0 %v1095
        %v1127 = vpop.xlane.xlu0 %1126
        %1128 = vadd.xlane.f32.xlu0 %v1097
        %v1129 = vpop.xlane.xlu0 %1128
        %1130 = vadd.xlane.f32.xlu0 %v1099
        %v1131 = vpop.xlane.xlu0 %1130
        %1132 = vadd.xlane.f32.xlu0 %v1101
        %v1133 = vpop.xlane.xlu0 %1132
        %1134 = vadd.xlane.f32.xlu0 %v1103
        %v1135 = vpop.xlane.xlu0 %1134
        %1136 = vadd.xlane.f32.xlu0 %v1105
        %v1137 = vpop.xlane.xlu0 %1136
        %1138 = vadd.xlane.f32.xlu0 %v1107
        %v1139 = vpop.xlane.xlu0 %1138
        %v1140 = vrcp.pop %v1109
        %v1141 = vrcp.pop %v1111
        %v1142 = vrcp.pop %v1113
        %v1143 = vrcp.pop %v1115
        %v1144 = vrcp.pop %v1117
        %v1145 = vrcp.pop %v1119
        %v1146 = vrcp.pop %v1121
        %v1147 = vrcp.pop %v1123
        %v1148 = vrcp.pop %v1125
        %v1149 = vrcp.pop %v1127
        %v1150 = vrcp.pop %v1129
        %v1151 = vrcp.pop %v1131
        %v1152 = vrcp.pop %v1133
        %v1153 = vrcp.pop %v1135
        %v1154 = vrcp.pop %v1137
        %v1155 = vrcp.pop %v1139
        %v1156 = vmul.f32 %v1077, %v1140
        %v1157 = vmul.f32 %v1079, %v1141
        %v1158 = vmul.f32 %v1081, %v1142
        %v1159 = vmul.f32 %v1083, %v1143
        %v1160 = vmul.f32 %v1085, %v1144
        %v1161 = vmul.f32 %v1087, %v1145
        %v1162 = vmul.f32 %v1089, %v1146
        %v1163 = vmul.f32 %v1091, %v1147
        %v1164 = vmul.f32 %v1093, %v1148
        %v1165 = vmul.f32 %v1095, %v1149
        %v1166 = vmul.f32 %v1097, %v1150
        %v1167 = vmul.f32 %v1099, %v1151
        %v1168 = vmul.f32 %v1101, %v1152
        %v1169 = vmul.f32 %v1103, %v1153
        %v1170 = vmul.f32 %v1105, %v1154
        %v1171 = vmul.f32 %v1107, %v1155
        %v1172 = vpack.c.bf16 %v1157, %v1156
        %v1173 = vpack.c.bf16 %v1159, %v1158
        %v1174 = vpack.c.bf16 %v1161, %v1160
        %v1175 = vpack.c.bf16 %v1163, %v1162
        %v1176 = vpack.c.bf16 %v1165, %v1164
        %v1177 = vpack.c.bf16 %v1167, %v1166
        %v1178 = vpack.c.bf16 %v1169, %v1168
        %v1179 = vpack.c.bf16 %v1171, %v1170
        %1180 = vmatprep.subr.bf16.mxu0 0
        %1181 = vmatpush1.bf16.xpose.msra.mxu0 %v1179
        %1182 = vmatprep.subr.bf16.mxu0 0
        %1183 = vmatpush1.bf16.xpose.msra.mxu0 %v1178
        %1184 = vmatprep.subr.bf16.mxu0 0
        %1185 = vmatpush1.bf16.xpose.msra.mxu0 %v1177
        %1186 = vmatprep.subr.bf16.mxu0 0
        %1187 = vmatpush1.bf16.xpose.msra.mxu0 %v1176
        %1188 = vmatprep.subr.bf16.mxu0 0
        %1189 = vmatpush1.bf16.xpose.msra.mxu0 %v1175
        %1190 = vmatprep.subr.bf16.mxu0 0
        %1191 = vmatpush1.bf16.xpose.msra.mxu0 %v1174
        %1192 = vmatprep.subr.bf16.mxu0 0
        %1193 = vmatpush1.bf16.xpose.msra.mxu0 %v1173
        %1194 = vmatprep.subr.bf16.mxu0 0
        %1195 = vmatpush1.bf16.xpose.msra.mxu0 %v1172
        %1196 = vmatprep.subr.bf16.mxu0 0
        %1197 = vmatpush2.bf16.xpose.msra.mxu0 0
        %1198 = vmatprep.subr.bf16.mxu0 0
        %1199 = vmatpush2.bf16.xpose.msra.mxu0 0
        %1200 = vmatprep.subr.bf16.mxu0 0
        %1201 = vmatpush2.bf16.xpose.msra.mxu0 0
        %1202 = vmatprep.subr.bf16.mxu0 0
        %1203 = vmatpush2.bf16.xpose.msra.mxu0 0
        %1204 = vmatprep.subr.bf16.mxu0 0
        %1205 = vmatpush2.bf16.xpose.msra.mxu0 0
        %1206 = vmatprep.subr.bf16.mxu0 0
        %1207 = vmatpush2.bf16.xpose.msra.mxu0 0
        %1208 = vmatprep.subr.bf16.mxu0 0
        %1209 = vmatpush2.bf16.xpose.msra.mxu0 0
        %1210 = vmatprep.subr.bf16.mxu0 0
        %1211 = vmatpush2.bf16.xpose.msra.mxu0 0
        %1212 = vmatprep.mubr.bf16.mxu0 0
        %1213 = vmatmul.mubr.bf16.gmra.mxu0 %v878
        %v1214 = vpop.f32.mrf.mxu0
        %v1215 = vadd.f32 0.0, %v1214
        %v1216 = vpop.f32.mrf.mxu0
        %v1217 = vpop.f32.mrf.mxu0
        %v1218 = vpop.f32.mrf.mxu0
        %1219 = vdwg.mxu0
        %1220 = vst [vmem:[#allocation4] sm:$0xff] %v1215
        %v1222 = vrot.slane %v872, 4
        %1224 = vxpose.xlu0.c.b16.start [1/8] %v1222, 128
        %1225 = vxpose.xlu0.c.b16.cont [2/8] 0, 128
        %1226 = vxpose.xlu0.c.b16.cont [3/8] 0, 128
        %1227 = vxpose.xlu0.c.b16.cont [4/8] 0, 128
        %1228 = vxpose.xlu0.c.b16.cont [5/8] 0, 128
        %1229 = vxpose.xlu0.c.b16.cont [6/8] 0, 128
        %1230 = vxpose.xlu0.c.b16.cont [7/8] 0, 128
        %1231 = vxpose.xlu0.c.b16.end [8/8] 0, 128
        %v1232 = vpop.trf.xlu0
        %v1233 = vpop.trf.xlu0
        %v1234 = vpop.trf.xlu0
        %v1235 = vpop.trf.xlu0
        %v1236 = vpop.trf.xlu0
        %v1237 = vpop.trf.xlu0
        %v1238 = vpop.trf.xlu0
        %v1239 = vpop.trf.xlu0
        %v1241 = vsel %vm902, %v1232, 0
        %v1244 = vsel %vm902, %v1233, 0
        %v1247 = vsel %vm902, %v1234, 0
        %v1250 = vsel %vm902, %v1235, 0
        %v1253 = vsel %vm902, %v1236, 0
        %v1256 = vsel %vm902, %v1237, 0
        %v1259 = vsel %vm902, %v1238, 0
        %v1262 = vsel %vm902, %v1239, 0
        %v1265 = vsel %vm927, %v875, 0
        %1267 = vmatprep.subr.bf16.mxu0 0
        %1268 = vmatpush1.bf16.msra.mxu0 0
        %1269 = vmatprep.subr.bf16.mxu0 0
        %1270 = vmatpush1.bf16.msra.mxu0 0
        %1271 = vmatprep.subr.bf16.mxu0 0
        %1272 = vmatpush1.bf16.msra.mxu0 0
        %1273 = vmatprep.subr.bf16.mxu0 0
        %1274 = vmatpush1.bf16.msra.mxu0 0
        %1275 = vmatprep.subr.bf16.mxu0 0
        %1276 = vmatpush1.bf16.msra.mxu0 0
        %1277 = vmatprep.subr.bf16.mxu0 0
        %1278 = vmatpush1.bf16.msra.mxu0 0
        %1279 = vmatprep.subr.bf16.mxu0 0
        %1280 = vmatpush1.bf16.msra.mxu0 0
        %1281 = vmatprep.subr.bf16.mxu0 0
        %1282 = vmatpush1.bf16.msra.mxu0 %v1265
        %1283 = vmatprep.subr.bf16.mxu0 0
        %1284 = vmatpush2.bf16.msra.mxu0 0
        %1285 = vmatprep.subr.bf16.mxu0 0
        %1286 = vmatpush2.bf16.msra.mxu0 0
        %1287 = vmatprep.subr.bf16.mxu0 0
        %1288 = vmatpush2.bf16.msra.mxu0 0
        %1289 = vmatprep.subr.bf16.mxu0 0
        %1290 = vmatpush2.bf16.msra.mxu0 0
        %1291 = vmatprep.subr.bf16.mxu0 0
        %1292 = vmatpush2.bf16.msra.mxu0 0
        %1293 = vmatprep.subr.bf16.mxu0 0
        %1294 = vmatpush2.bf16.msra.mxu0 0
        %1295 = vmatprep.subr.bf16.mxu0 0
        %1296 = vmatpush2.bf16.msra.mxu0 0
        %1297 = vmatprep.subr.bf16.mxu0 0
        %1298 = vmatpush2.bf16.msra.mxu0 0
        %1299 = vmatprep.mubr.bf16.mxu0 0
        %1300 = vmatmul.mubr.bf16.gmra.mxu0 %v1241
        %v1301 = vpop.f32.mrf.mxu0
        %v1302 = vadd.f32 %v885, %v1301
        %v1303 = vpop.f32.mrf.mxu0
        %v1304 = vpop.f32.mrf.mxu0
        %v1305 = vadd.f32 %v885, %v1304
        %v1306 = vpop.f32.mrf.mxu0
        %1307 = vmatprep.mubr.bf16.mxu0 0
        %1308 = vmatmul.mubr.bf16.gmra.mxu0 %v1244
        %v1309 = vpop.f32.mrf.mxu0
        %v1310 = vadd.f32 %v885, %v1309
        %v1311 = vpop.f32.mrf.mxu0
        %v1312 = vpop.f32.mrf.mxu0
        %v1313 = vadd.f32 %v885, %v1312
        %v1314 = vpop.f32.mrf.mxu0
        %1315 = vmatprep.mubr.bf16.mxu0 0
        %1316 = vmatmul.mubr.bf16.gmra.mxu0 %v1247
        %v1317 = vpop.f32.mrf.mxu0
        %v1318 = vadd.f32 %v885, %v1317
        %v1319 = vpop.f32.mrf.mxu0
        %v1320 = vpop.f32.mrf.mxu0
        %v1321 = vadd.f32 %v885, %v1320
        %v1322 = vpop.f32.mrf.mxu0
        %1323 = vmatprep.mubr.bf16.mxu0 0
        %1324 = vmatmul.mubr.bf16.gmra.mxu0 %v1250
        %v1325 = vpop.f32.mrf.mxu0
        %v1326 = vadd.f32 %v885, %v1325
        %v1327 = vpop.f32.mrf.mxu0
        %v1328 = vpop.f32.mrf.mxu0
        %v1329 = vadd.f32 %v885, %v1328
        %v1330 = vpop.f32.mrf.mxu0
        %1331 = vmatprep.mubr.bf16.mxu0 0
        %1332 = vmatmul.mubr.bf16.gmra.mxu0 %v1253
        %v1333 = vpop.f32.mrf.mxu0
        %v1334 = vadd.f32 %v885, %v1333
        %v1335 = vpop.f32.mrf.mxu0
        %v1336 = vpop.f32.mrf.mxu0
        %v1337 = vadd.f32 %v885, %v1336
        %v1338 = vpop.f32.mrf.mxu0
        %1339 = vmatprep.mubr.bf16.mxu0 0
        %1340 = vmatmul.mubr.bf16.gmra.mxu0 %v1256
        %v1341 = vpop.f32.mrf.mxu0
        %v1342 = vadd.f32 %v885, %v1341
        %v1343 = vpop.f32.mrf.mxu0
        %v1344 = vpop.f32.mrf.mxu0
        %v1345 = vadd.f32 %v885, %v1344
        %v1346 = vpop.f32.mrf.mxu0
        %1347 = vmatprep.mubr.bf16.mxu0 0
        %1348 = vmatmul.mubr.bf16.gmra.mxu0 %v1259
        %v1349 = vpop.f32.mrf.mxu0
        %v1350 = vadd.f32 %v885, %v1349
        %v1351 = vpop.f32.mrf.mxu0
        %v1352 = vpop.f32.mrf.mxu0
        %v1353 = vadd.f32 %v885, %v1352
        %v1354 = vpop.f32.mrf.mxu0
        %1355 = vmatprep.mubr.bf16.mxu0 0
        %1356 = vmatmul.mubr.bf16.gmra.mxu0 %v1262
        %v1357 = vpop.f32.mrf.mxu0
        %v1358 = vadd.f32 %v885, %v1357
        %v1359 = vpop.f32.mrf.mxu0
        %v1360 = vpop.f32.mrf.mxu0
        %v1361 = vadd.f32 %v885, %v1360
        %v1362 = vpop.f32.mrf.mxu0
        %1363 = vdwg.mxu0
        %1364 = vmax.xlane.f32.xlu0 %v1302
        %v1365 = vpop.xlane.xlu0 %1364
        %1366 = vmax.xlane.f32.xlu0 %v1305
        %v1367 = vpop.xlane.xlu0 %1366
        %1368 = vmax.xlane.f32.xlu0 %v1310
        %v1369 = vpop.xlane.xlu0 %1368
        %1370 = vmax.xlane.f32.xlu0 %v1313
        %v1371 = vpop.xlane.xlu0 %1370
        %1372 = vmax.xlane.f32.xlu0 %v1318
        %v1373 = vpop.xlane.xlu0 %1372
        %1374 = vmax.xlane.f32.xlu0 %v1321
        %v1375 = vpop.xlane.xlu0 %1374
        %1376 = vmax.xlane.f32.xlu0 %v1326
        %v1377 = vpop.xlane.xlu0 %1376
        %1378 = vmax.xlane.f32.xlu0 %v1329
        %v1379 = vpop.xlane.xlu0 %1378
        %1380 = vmax.xlane.f32.xlu0 %v1334
        %v1381 = vpop.xlane.xlu0 %1380
        %1382 = vmax.xlane.f32.xlu0 %v1337
        %v1383 = vpop.xlane.xlu0 %1382
        %1384 = vmax.xlane.f32.xlu0 %v1342
        %v1385 = vpop.xlane.xlu0 %1384
        %1386 = vmax.xlane.f32.xlu0 %v1345
        %v1387 = vpop.xlane.xlu0 %1386
        %1388 = vmax.xlane.f32.xlu0 %v1350
        %v1389 = vpop.xlane.xlu0 %1388
        %1390 = vmax.xlane.f32.xlu0 %v1353
        %v1391 = vpop.xlane.xlu0 %1390
        %1392 = vmax.xlane.f32.xlu0 %v1358
        %v1393 = vpop.xlane.xlu0 %1392
        %1394 = vmax.xlane.f32.xlu0 %v1361
        %v1395 = vpop.xlane.xlu0 %1394
        %v1396 = vsub.f32 %v1302, %v1365
        %v1397 = vsub.f32 %v1305, %v1367
        %v1398 = vsub.f32 %v1310, %v1369
        %v1399 = vsub.f32 %v1313, %v1371
        %v1400 = vsub.f32 %v1318, %v1373
        %v1401 = vsub.f32 %v1321, %v1375
        %v1402 = vsub.f32 %v1326, %v1377
        %v1403 = vsub.f32 %v1329, %v1379
        %v1404 = vsub.f32 %v1334, %v1381
        %v1405 = vsub.f32 %v1337, %v1383
        %v1406 = vsub.f32 %v1342, %v1385
        %v1407 = vsub.f32 %v1345, %v1387
        %v1408 = vsub.f32 %v1350, %v1389
        %v1409 = vsub.f32 %v1353, %v1391
        %v1410 = vsub.f32 %v1358, %v1393
        %v1411 = vsub.f32 %v1361, %v1395
        %v1412 = vmul.f32 %v1396, 1.442695
        %v1413 = vpow.pop %v1412
        %v1414 = vmul.f32 %v1397, 1.442695
        %v1415 = vpow.pop %v1414
        %v1416 = vmul.f32 %v1398, 1.442695
        %v1417 = vpow.pop %v1416
        %v1418 = vmul.f32 %v1399, 1.442695
        %v1419 = vpow.pop %v1418
        %v1420 = vmul.f32 %v1400, 1.442695
        %v1421 = vpow.pop %v1420
        %v1422 = vmul.f32 %v1401, 1.442695
        %v1423 = vpow.pop %v1422
        %v1424 = vmul.f32 %v1402, 1.442695
        %v1425 = vpow.pop %v1424
        %v1426 = vmul.f32 %v1403, 1.442695
        %v1427 = vpow.pop %v1426
        %v1428 = vmul.f32 %v1404, 1.442695
        %v1429 = vpow.pop %v1428
        %v1430 = vmul.f32 %v1405, 1.442695
        %v1431 = vpow.pop %v1430
        %v1432 = vmul.f32 %v1406, 1.442695
        %v1433 = vpow.pop %v1432
        %v1434 = vmul.f32 %v1407, 1.442695
        %v1435 = vpow.pop %v1434
        %v1436 = vmul.f32 %v1408, 1.442695
        %v1437 = vpow.pop %v1436
        %v1438 = vmul.f32 %v1409, 1.442695
        %v1439 = vpow.pop %v1438
        %v1440 = vmul.f32 %v1410, 1.442695
        %v1441 = vpow.pop %v1440
        %v1442 = vmul.f32 %v1411, 1.442695
        %v1443 = vpow.pop %v1442
        %1444 = vadd.xlane.f32.xlu0 %v1413
        %v1445 = vpop.xlane.xlu0 %1444
        %1446 = vadd.xlane.f32.xlu0 %v1415
        %v1447 = vpop.xlane.xlu0 %1446
        %1448 = vadd.xlane.f32.xlu0 %v1417
        %v1449 = vpop.xlane.xlu0 %1448
        %1450 = vadd.xlane.f32.xlu0 %v1419
        %v1451 = vpop.xlane.xlu0 %1450
        %1452 = vadd.xlane.f32.xlu0 %v1421
        %v1453 = vpop.xlane.xlu0 %1452
        %1454 = vadd.xlane.f32.xlu0 %v1423
        %v1455 = vpop.xlane.xlu0 %1454
        %1456 = vadd.xlane.f32.xlu0 %v1425
        %v1457 = vpop.xlane.xlu0 %1456
        %1458 = vadd.xlane.f32.xlu0 %v1427
        %v1459 = vpop.xlane.xlu0 %1458
        %1460 = vadd.xlane.f32.xlu0 %v1429
        %v1461 = vpop.xlane.xlu0 %1460
        %1462 = vadd.xlane.f32.xlu0 %v1431
        %v1463 = vpop.xlane.xlu0 %1462
        %1464 = vadd.xlane.f32.xlu0 %v1433
        %v1465 = vpop.xlane.xlu0 %1464
        %1466 = vadd.xlane.f32.xlu0 %v1435
        %v1467 = vpop.xlane.xlu0 %1466
        %1468 = vadd.xlane.f32.xlu0 %v1437
        %v1469 = vpop.xlane.xlu0 %1468
        %1470 = vadd.xlane.f32.xlu0 %v1439
        %v1471 = vpop.xlane.xlu0 %1470
        %1472 = vadd.xlane.f32.xlu0 %v1441
        %v1473 = vpop.xlane.xlu0 %1472
        %1474 = vadd.xlane.f32.xlu0 %v1443
        %v1475 = vpop.xlane.xlu0 %1474
        %v1476 = vrcp.pop %v1445
        %v1477 = vrcp.pop %v1447
        %v1478 = vrcp.pop %v1449
        %v1479 = vrcp.pop %v1451
        %v1480 = vrcp.pop %v1453
        %v1481 = vrcp.pop %v1455
        %v1482 = vrcp.pop %v1457
        %v1483 = vrcp.pop %v1459
        %v1484 = vrcp.pop %v1461
        %v1485 = vrcp.pop %v1463
        %v1486 = vrcp.pop %v1465
        %v1487 = vrcp.pop %v1467
        %v1488 = vrcp.pop %v1469
        %v1489 = vrcp.pop %v1471
        %v1490 = vrcp.pop %v1473
        %v1491 = vrcp.pop %v1475
        %v1492 = vmul.f32 %v1413, %v1476
        %v1493 = vmul.f32 %v1415, %v1477
        %v1494 = vmul.f32 %v1417, %v1478
        %v1495 = vmul.f32 %v1419, %v1479
        %v1496 = vmul.f32 %v1421, %v1480
        %v1497 = vmul.f32 %v1423, %v1481
        %v1498 = vmul.f32 %v1425, %v1482
        %v1499 = vmul.f32 %v1427, %v1483
        %v1500 = vmul.f32 %v1429, %v1484
        %v1501 = vmul.f32 %v1431, %v1485
        %v1502 = vmul.f32 %v1433, %v1486
        %v1503 = vmul.f32 %v1435, %v1487
        %v1504 = vmul.f32 %v1437, %v1488
        %v1505 = vmul.f32 %v1439, %v1489
        %v1506 = vmul.f32 %v1441, %v1490
        %v1507 = vmul.f32 %v1443, %v1491
        %v1508 = vpack.c.bf16 %v1493, %v1492
        %v1509 = vpack.c.bf16 %v1495, %v1494
        %v1510 = vpack.c.bf16 %v1497, %v1496
        %v1511 = vpack.c.bf16 %v1499, %v1498
        %v1512 = vpack.c.bf16 %v1501, %v1500
        %v1513 = vpack.c.bf16 %v1503, %v1502
        %v1514 = vpack.c.bf16 %v1505, %v1504
        %v1515 = vpack.c.bf16 %v1507, %v1506
        %1516 = vmatprep.subr.bf16.mxu0 0
        %1517 = vmatpush1.bf16.xpose.msra.mxu0 %v1515
        %1518 = vmatprep.subr.bf16.mxu0 0
        %1519 = vmatpush1.bf16.xpose.msra.mxu0 %v1514
        %1520 = vmatprep.subr.bf16.mxu0 0
        %1521 = vmatpush1.bf16.xpose.msra.mxu0 %v1513
        %1522 = vmatprep.subr.bf16.mxu0 0
        %1523 = vmatpush1.bf16.xpose.msra.mxu0 %v1512
        %1524 = vmatprep.subr.bf16.mxu0 0
        %1525 = vmatpush1.bf16.xpose.msra.mxu0 %v1511
        %1526 = vmatprep.subr.bf16.mxu0 0
        %1527 = vmatpush1.bf16.xpose.msra.mxu0 %v1510
        %1528 = vmatprep.subr.bf16.mxu0 0
        %1529 = vmatpush1.bf16.xpose.msra.mxu0 %v1509
        %1530 = vmatprep.subr.bf16.mxu0 0
        %1531 = vmatpush1.bf16.xpose.msra.mxu0 %v1508
        %1532 = vmatprep.subr.bf16.mxu0 0
        %1533 = vmatpush2.bf16.xpose.msra.mxu0 0
        %1534 = vmatprep.subr.bf16.mxu0 0
        %1535 = vmatpush2.bf16.xpose.msra.mxu0 0
        %1536 = vmatprep.subr.bf16.mxu0 0
        %1537 = vmatpush2.bf16.xpose.msra.mxu0 0
        %1538 = vmatprep.subr.bf16.mxu0 0
        %1539 = vmatpush2.bf16.xpose.msra.mxu0 0
        %1540 = vmatprep.subr.bf16.mxu0 0
        %1541 = vmatpush2.bf16.xpose.msra.mxu0 0
        %1542 = vmatprep.subr.bf16.mxu0 0
        %1543 = vmatpush2.bf16.xpose.msra.mxu0 0
        %1544 = vmatprep.subr.bf16.mxu0 0
        %1545 = vmatpush2.bf16.xpose.msra.mxu0 0
        %1546 = vmatprep.subr.bf16.mxu0 0
        %1547 = vmatpush2.bf16.xpose.msra.mxu0 0
        %1548 = vmatprep.mubr.bf16.mxu0 0
        %1549 = vmatmul.mubr.bf16.gmra.mxu0 %v879
        %v1550 = vpop.f32.mrf.mxu0
        %v1551 = vadd.f32 0.0, %v1550
        %v1552 = vpop.f32.mrf.mxu0
        %v1553 = vpop.f32.mrf.mxu0
        %v1554 = vpop.f32.mrf.mxu0
        %1555 = vdwg.mxu0
        %1556 = vst [vmem:[#allocation4 + $0x8] sm:$0xff] %v1551
        %1557 = vxpose.xlu0.c.b16.start [1/8] %v873, 128
        %1558 = vxpose.xlu0.c.b16.cont [2/8] 0, 128
        %1559 = vxpose.xlu0.c.b16.cont [3/8] 0, 128
        %1560 = vxpose.xlu0.c.b16.cont [4/8] 0, 128
        %1561 = vxpose.xlu0.c.b16.cont [5/8] 0, 128
        %1562 = vxpose.xlu0.c.b16.cont [6/8] 0, 128
        %1563 = vxpose.xlu0.c.b16.cont [7/8] 0, 128
        %1564 = vxpose.xlu0.c.b16.end [8/8] 0, 128
        %v1565 = vpop.trf.xlu0
        %v1566 = vpop.trf.xlu0
        %v1567 = vpop.trf.xlu0
        %v1568 = vpop.trf.xlu0
        %v1569 = vpop.trf.xlu0
        %v1570 = vpop.trf.xlu0
        %v1571 = vpop.trf.xlu0
        %v1572 = vpop.trf.xlu0
        %v1574 = vsel %vm902, %v1565, 0
        %v1577 = vsel %vm902, %v1566, 0
        %v1580 = vsel %vm902, %v1567, 0
        %v1583 = vsel %vm902, %v1568, 0
        %v1586 = vsel %vm902, %v1569, 0
        %v1589 = vsel %vm902, %v1570, 0
        %v1592 = vsel %vm902, %v1571, 0
        %v1595 = vsel %vm902, %v1572, 0
        %v1598 = vsel %vm927, %v876, 0
        %1600 = vmatprep.subr.bf16.mxu0 0
        %1601 = vmatpush1.bf16.msra.mxu0 0
        %1602 = vmatprep.subr.bf16.mxu0 0
        %1603 = vmatpush1.bf16.msra.mxu0 0
        %1604 = vmatprep.subr.bf16.mxu0 0
        %1605 = vmatpush1.bf16.msra.mxu0 0
        %1606 = vmatprep.subr.bf16.mxu0 0
        %1607 = vmatpush1.bf16.msra.mxu0 0
        %1608 = vmatprep.subr.bf16.mxu0 0
        %1609 = vmatpush1.bf16.msra.mxu0 0
        %1610 = vmatprep.subr.bf16.mxu0 0
        %1611 = vmatpush1.bf16.msra.mxu0 0
        %1612 = vmatprep.subr.bf16.mxu0 0
        %1613 = vmatpush1.bf16.msra.mxu0 0
        %1614 = vmatprep.subr.bf16.mxu0 0
        %1615 = vmatpush1.bf16.msra.mxu0 %v1598
        %1616 = vmatprep.subr.bf16.mxu0 0
        %1617 = vmatpush2.bf16.msra.mxu0 0
        %1618 = vmatprep.subr.bf16.mxu0 0
        %1619 = vmatpush2.bf16.msra.mxu0 0
        %1620 = vmatprep.subr.bf16.mxu0 0
        %1621 = vmatpush2.bf16.msra.mxu0 0
        %1622 = vmatprep.subr.bf16.mxu0 0
        %1623 = vmatpush2.bf16.msra.mxu0 0
        %1624 = vmatprep.subr.bf16.mxu0 0
        %1625 = vmatpush2.bf16.msra.mxu0 0
        %1626 = vmatprep.subr.bf16.mxu0 0
        %1627 = vmatpush2.bf16.msra.mxu0 0
        %1628 = vmatprep.subr.bf16.mxu0 0
        %1629 = vmatpush2.bf16.msra.mxu0 0
        %1630 = vmatprep.subr.bf16.mxu0 0
        %1631 = vmatpush2.bf16.msra.mxu0 0
        %1632 = vmatprep.mubr.bf16.mxu0 0
        %1633 = vmatmul.mubr.bf16.gmra.mxu0 %v1574
        %v1634 = vpop.f32.mrf.mxu0
        %v1635 = vadd.f32 %v885, %v1634
        %v1636 = vpop.f32.mrf.mxu0
        %v1637 = vpop.f32.mrf.mxu0
        %v1638 = vadd.f32 %v885, %v1637
        %v1639 = vpop.f32.mrf.mxu0
        %1640 = vmatprep.mubr.bf16.mxu0 0
        %1641 = vmatmul.mubr.bf16.gmra.mxu0 %v1577
        %v1642 = vpop.f32.mrf.mxu0
        %v1643 = vadd.f32 %v885, %v1642
        %v1644 = vpop.f32.mrf.mxu0
        %v1645 = vpop.f32.mrf.mxu0
        %v1646 = vadd.f32 %v885, %v1645
        %v1647 = vpop.f32.mrf.mxu0
        %1648 = vmatprep.mubr.bf16.mxu0 0
        %1649 = vmatmul.mubr.bf16.gmra.mxu0 %v1580
        %v1650 = vpop.f32.mrf.mxu0
        %v1651 = vadd.f32 %v885, %v1650
        %v1652 = vpop.f32.mrf.mxu0
        %v1653 = vpop.f32.mrf.mxu0
        %v1654 = vadd.f32 %v885, %v1653
        %v1655 = vpop.f32.mrf.mxu0
        %1656 = vmatprep.mubr.bf16.mxu0 0
        %1657 = vmatmul.mubr.bf16.gmra.mxu0 %v1583
        %v1658 = vpop.f32.mrf.mxu0
        %v1659 = vadd.f32 %v885, %v1658
        %v1660 = vpop.f32.mrf.mxu0
        %v1661 = vpop.f32.mrf.mxu0
        %v1662 = vadd.f32 %v885, %v1661
        %v1663 = vpop.f32.mrf.mxu0
        %1664 = vmatprep.mubr.bf16.mxu0 0
        %1665 = vmatmul.mubr.bf16.gmra.mxu0 %v1586
        %v1666 = vpop.f32.mrf.mxu0
        %v1667 = vadd.f32 %v885, %v1666
        %v1668 = vpop.f32.mrf.mxu0
        %v1669 = vpop.f32.mrf.mxu0
        %v1670 = vadd.f32 %v885, %v1669
        %v1671 = vpop.f32.mrf.mxu0
        %1672 = vmatprep.mubr.bf16.mxu0 0
        %1673 = vmatmul.mubr.bf16.gmra.mxu0 %v1589
        %v1674 = vpop.f32.mrf.mxu0
        %v1675 = vadd.f32 %v885, %v1674
        %v1676 = vpop.f32.mrf.mxu0
        %v1677 = vpop.f32.mrf.mxu0
        %v1678 = vadd.f32 %v885, %v1677
        %v1679 = vpop.f32.mrf.mxu0
        %1680 = vmatprep.mubr.bf16.mxu0 0
        %1681 = vmatmul.mubr.bf16.gmra.mxu0 %v1592
        %v1682 = vpop.f32.mrf.mxu0
        %v1683 = vadd.f32 %v885, %v1682
        %v1684 = vpop.f32.mrf.mxu0
        %v1685 = vpop.f32.mrf.mxu0
        %v1686 = vadd.f32 %v885, %v1685
        %v1687 = vpop.f32.mrf.mxu0
        %1688 = vmatprep.mubr.bf16.mxu0 0
        %1689 = vmatmul.mubr.bf16.gmra.mxu0 %v1595
        %v1690 = vpop.f32.mrf.mxu0
        %v1691 = vadd.f32 %v885, %v1690
        %v1692 = vpop.f32.mrf.mxu0
        %v1693 = vpop.f32.mrf.mxu0
        %v1694 = vadd.f32 %v885, %v1693
        %v1695 = vpop.f32.mrf.mxu0
        %1696 = vdwg.mxu0
        %1697 = vmax.xlane.f32.xlu0 %v1635
        %v1698 = vpop.xlane.xlu0 %1697
        %1699 = vmax.xlane.f32.xlu0 %v1638
        %v1700 = vpop.xlane.xlu0 %1699
        %1701 = vmax.xlane.f32.xlu0 %v1643
        %v1702 = vpop.xlane.xlu0 %1701
        %1703 = vmax.xlane.f32.xlu0 %v1646
        %v1704 = vpop.xlane.xlu0 %1703
        %1705 = vmax.xlane.f32.xlu0 %v1651
        %v1706 = vpop.xlane.xlu0 %1705
        %1707 = vmax.xlane.f32.xlu0 %v1654
        %v1708 = vpop.xlane.xlu0 %1707
        %1709 = vmax.xlane.f32.xlu0 %v1659
        %v1710 = vpop.xlane.xlu0 %1709
        %1711 = vmax.xlane.f32.xlu0 %v1662
        %v1712 = vpop.xlane.xlu0 %1711
        %1713 = vmax.xlane.f32.xlu0 %v1667
        %v1714 = vpop.xlane.xlu0 %1713
        %1715 = vmax.xlane.f32.xlu0 %v1670
        %v1716 = vpop.xlane.xlu0 %1715
        %1717 = vmax.xlane.f32.xlu0 %v1675
        %v1718 = vpop.xlane.xlu0 %1717
        %1719 = vmax.xlane.f32.xlu0 %v1678
        %v1720 = vpop.xlane.xlu0 %1719
        %1721 = vmax.xlane.f32.xlu0 %v1683
        %v1722 = vpop.xlane.xlu0 %1721
        %1723 = vmax.xlane.f32.xlu0 %v1686
        %v1724 = vpop.xlane.xlu0 %1723
        %1725 = vmax.xlane.f32.xlu0 %v1691
        %v1726 = vpop.xlane.xlu0 %1725
        %1727 = vmax.xlane.f32.xlu0 %v1694
        %v1728 = vpop.xlane.xlu0 %1727
        %v1729 = vsub.f32 %v1635, %v1698
        %v1730 = vsub.f32 %v1638, %v1700
        %v1731 = vsub.f32 %v1643, %v1702
        %v1732 = vsub.f32 %v1646, %v1704
        %v1733 = vsub.f32 %v1651, %v1706
        %v1734 = vsub.f32 %v1654, %v1708
        %v1735 = vsub.f32 %v1659, %v1710
        %v1736 = vsub.f32 %v1662, %v1712
        %v1737 = vsub.f32 %v1667, %v1714
        %v1738 = vsub.f32 %v1670, %v1716
        %v1739 = vsub.f32 %v1675, %v1718
        %v1740 = vsub.f32 %v1678, %v1720
        %v1741 = vsub.f32 %v1683, %v1722
        %v1742 = vsub.f32 %v1686, %v1724
        %v1743 = vsub.f32 %v1691, %v1726
        %v1744 = vsub.f32 %v1694, %v1728
        %v1745 = vmul.f32 %v1729, 1.442695
        %v1746 = vpow.pop %v1745
        %v1747 = vmul.f32 %v1730, 1.442695
        %v1748 = vpow.pop %v1747
        %v1749 = vmul.f32 %v1731, 1.442695
        %v1750 = vpow.pop %v1749
        %v1751 = vmul.f32 %v1732, 1.442695
        %v1752 = vpow.pop %v1751
        %v1753 = vmul.f32 %v1733, 1.442695
        %v1754 = vpow.pop %v1753
        %v1755 = vmul.f32 %v1734, 1.442695
        %v1756 = vpow.pop %v1755
        %v1757 = vmul.f32 %v1735, 1.442695
        %v1758 = vpow.pop %v1757
        %v1759 = vmul.f32 %v1736, 1.442695
        %v1760 = vpow.pop %v1759
        %v1761 = vmul.f32 %v1737, 1.442695
        %v1762 = vpow.pop %v1761
        %v1763 = vmul.f32 %v1738, 1.442695
        %v1764 = vpow.pop %v1763
        %v1765 = vmul.f32 %v1739, 1.442695
        %v1766 = vpow.pop %v1765
        %v1767 = vmul.f32 %v1740, 1.442695
        %v1768 = vpow.pop %v1767
        %v1769 = vmul.f32 %v1741, 1.442695
        %v1770 = vpow.pop %v1769
        %v1771 = vmul.f32 %v1742, 1.442695
        %v1772 = vpow.pop %v1771
        %v1773 = vmul.f32 %v1743, 1.442695
        %v1774 = vpow.pop %v1773
        %v1775 = vmul.f32 %v1744, 1.442695
        %v1776 = vpow.pop %v1775
        %1777 = vadd.xlane.f32.xlu0 %v1746
        %v1778 = vpop.xlane.xlu0 %1777
        %1779 = vadd.xlane.f32.xlu0 %v1748
        %v1780 = vpop.xlane.xlu0 %1779
        %1781 = vadd.xlane.f32.xlu0 %v1750
        %v1782 = vpop.xlane.xlu0 %1781
        %1783 = vadd.xlane.f32.xlu0 %v1752
        %v1784 = vpop.xlane.xlu0 %1783
        %1785 = vadd.xlane.f32.xlu0 %v1754
        %v1786 = vpop.xlane.xlu0 %1785
        %1787 = vadd.xlane.f32.xlu0 %v1756
        %v1788 = vpop.xlane.xlu0 %1787
        %1789 = vadd.xlane.f32.xlu0 %v1758
        %v1790 = vpop.xlane.xlu0 %1789
        %1791 = vadd.xlane.f32.xlu0 %v1760
        %v1792 = vpop.xlane.xlu0 %1791
        %1793 = vadd.xlane.f32.xlu0 %v1762
        %v1794 = vpop.xlane.xlu0 %1793
        %1795 = vadd.xlane.f32.xlu0 %v1764
        %v1796 = vpop.xlane.xlu0 %1795
        %1797 = vadd.xlane.f32.xlu0 %v1766
        %v1798 = vpop.xlane.xlu0 %1797
        %1799 = vadd.xlane.f32.xlu0 %v1768
        %v1800 = vpop.xlane.xlu0 %1799
        %1801 = vadd.xlane.f32.xlu0 %v1770
        %v1802 = vpop.xlane.xlu0 %1801
        %1803 = vadd.xlane.f32.xlu0 %v1772
        %v1804 = vpop.xlane.xlu0 %1803
        %1805 = vadd.xlane.f32.xlu0 %v1774
        %v1806 = vpop.xlane.xlu0 %1805
        %1807 = vadd.xlane.f32.xlu0 %v1776
        %v1808 = vpop.xlane.xlu0 %1807
        %v1809 = vrcp.pop %v1778
        %v1810 = vrcp.pop %v1780
        %v1811 = vrcp.pop %v1782
        %v1812 = vrcp.pop %v1784
        %v1813 = vrcp.pop %v1786
        %v1814 = vrcp.pop %v1788
        %v1815 = vrcp.pop %v1790
        %v1816 = vrcp.pop %v1792
        %v1817 = vrcp.pop %v1794
        %v1818 = vrcp.pop %v1796
        %v1819 = vrcp.pop %v1798
        %v1820 = vrcp.pop %v1800
        %v1821 = vrcp.pop %v1802
        %v1822 = vrcp.pop %v1804
        %v1823 = vrcp.pop %v1806
        %v1824 = vrcp.pop %v1808
        %v1825 = vmul.f32 %v1746, %v1809
        %v1826 = vmul.f32 %v1748, %v1810
        %v1827 = vmul.f32 %v1750, %v1811
        %v1828 = vmul.f32 %v1752, %v1812
        %v1829 = vmul.f32 %v1754, %v1813
        %v1830 = vmul.f32 %v1756, %v1814
        %v1831 = vmul.f32 %v1758, %v1815
        %v1832 = vmul.f32 %v1760, %v1816
        %v1833 = vmul.f32 %v1762, %v1817
        %v1834 = vmul.f32 %v1764, %v1818
        %v1835 = vmul.f32 %v1766, %v1819
        %v1836 = vmul.f32 %v1768, %v1820
        %v1837 = vmul.f32 %v1770, %v1821
        %v1838 = vmul.f32 %v1772, %v1822
        %v1839 = vmul.f32 %v1774, %v1823
        %v1840 = vmul.f32 %v1776, %v1824
        %v1841 = vpack.c.bf16 %v1826, %v1825
        %v1842 = vpack.c.bf16 %v1828, %v1827
        %v1843 = vpack.c.bf16 %v1830, %v1829
        %v1844 = vpack.c.bf16 %v1832, %v1831
        %v1845 = vpack.c.bf16 %v1834, %v1833
        %v1846 = vpack.c.bf16 %v1836, %v1835
        %v1847 = vpack.c.bf16 %v1838, %v1837
        %v1848 = vpack.c.bf16 %v1840, %v1839
        %1849 = vmatprep.subr.bf16.mxu0 0
        %1850 = vmatpush1.bf16.xpose.msra.mxu0 %v1848
        %1851 = vmatprep.subr.bf16.mxu0 0
        %1852 = vmatpush1.bf16.xpose.msra.mxu0 %v1847
        %1853 = vmatprep.subr.bf16.mxu0 0
        %1854 = vmatpush1.bf16.xpose.msra.mxu0 %v1846
        %1855 = vmatprep.subr.bf16.mxu0 0
        %1856 = vmatpush1.bf16.xpose.msra.mxu0 %v1845
        %1857 = vmatprep.subr.bf16.mxu0 0
        %1858 = vmatpush1.bf16.xpose.msra.mxu0 %v1844
        %1859 = vmatprep.subr.bf16.mxu0 0
        %1860 = vmatpush1.bf16.xpose.msra.mxu0 %v1843
        %1861 = vmatprep.subr.bf16.mxu0 0
        %1862 = vmatpush1.bf16.xpose.msra.mxu0 %v1842
        %1863 = vmatprep.subr.bf16.mxu0 0
        %1864 = vmatpush1.bf16.xpose.msra.mxu0 %v1841
        %1865 = vmatprep.subr.bf16.mxu0 0
        %1866 = vmatpush2.bf16.xpose.msra.mxu0 0
        %1867 = vmatprep.subr.bf16.mxu0 0
        %1868 = vmatpush2.bf16.xpose.msra.mxu0 0
        %1869 = vmatprep.subr.bf16.mxu0 0
        %1870 = vmatpush2.bf16.xpose.msra.mxu0 0
        %1871 = vmatprep.subr.bf16.mxu0 0
        %1872 = vmatpush2.bf16.xpose.msra.mxu0 0
        %1873 = vmatprep.subr.bf16.mxu0 0
        %1874 = vmatpush2.bf16.xpose.msra.mxu0 0
        %1875 = vmatprep.subr.bf16.mxu0 0
        %1876 = vmatpush2.bf16.xpose.msra.mxu0 0
        %1877 = vmatprep.subr.bf16.mxu0 0
        %1878 = vmatpush2.bf16.xpose.msra.mxu0 0
        %1879 = vmatprep.subr.bf16.mxu0 0
        %1880 = vmatpush2.bf16.xpose.msra.mxu0 0
        %1881 = vmatprep.mubr.bf16.mxu0 0
        %1882 = vmatmul.mubr.bf16.gmra.mxu0 %v880
        %v1883 = vpop.f32.mrf.mxu0
        %v1884 = vadd.f32 0.0, %v1883
        %v1885 = vpop.f32.mrf.mxu0
        %v1886 = vpop.f32.mrf.mxu0
        %v1887 = vpop.f32.mrf.mxu0
        %1888 = vdwg.mxu0
        %1889 = vst [vmem:[#allocation4 + $0x10] sm:$0xff] %v1884
        %v1891 = vrot.slane %v873, 4
        %1893 = vxpose.xlu0.c.b16.start [1/8] %v1891, 128
        %1894 = vxpose.xlu0.c.b16.cont [2/8] 0, 128
        %1895 = vxpose.xlu0.c.b16.cont [3/8] 0, 128
        %1896 = vxpose.xlu0.c.b16.cont [4/8] 0, 128
        %1897 = vxpose.xlu0.c.b16.cont [5/8] 0, 128
        %1898 = vxpose.xlu0.c.b16.cont [6/8] 0, 128
        %1899 = vxpose.xlu0.c.b16.cont [7/8] 0, 128
        %1900 = vxpose.xlu0.c.b16.end [8/8] 0, 128
        %v1901 = vpop.trf.xlu0
        %v1902 = vpop.trf.xlu0
        %v1903 = vpop.trf.xlu0
        %v1904 = vpop.trf.xlu0
        %v1905 = vpop.trf.xlu0
        %v1906 = vpop.trf.xlu0
        %v1907 = vpop.trf.xlu0
        %v1908 = vpop.trf.xlu0
        %v1910 = vsel %vm902, %v1901, 0
        %v1913 = vsel %vm902, %v1902, 0
        %v1916 = vsel %vm902, %v1903, 0
        %v1919 = vsel %vm902, %v1904, 0
        %v1922 = vsel %vm902, %v1905, 0
        %v1925 = vsel %vm902, %v1906, 0
        %v1928 = vsel %vm902, %v1907, 0
        %v1931 = vsel %vm902, %v1908, 0
        %v1934 = vsel %vm927, %v877, 0
        %1936 = vmatprep.subr.bf16.mxu0 0
        %1937 = vmatpush1.bf16.msra.mxu0 0
        %1938 = vmatprep.subr.bf16.mxu0 0
        %1939 = vmatpush1.bf16.msra.mxu0 0
        %1940 = vmatprep.subr.bf16.mxu0 0
        %1941 = vmatpush1.bf16.msra.mxu0 0
        %1942 = vmatprep.subr.bf16.mxu0 0
        %1943 = vmatpush1.bf16.msra.mxu0 0
        %1944 = vmatprep.subr.bf16.mxu0 0
        %1945 = vmatpush1.bf16.msra.mxu0 0
        %1946 = vmatprep.subr.bf16.mxu0 0
        %1947 = vmatpush1.bf16.msra.mxu0 0
        %1948 = vmatprep.subr.bf16.mxu0 0
        %1949 = vmatpush1.bf16.msra.mxu0 0
        %1950 = vmatprep.subr.bf16.mxu0 0
        %1951 = vmatpush1.bf16.msra.mxu0 %v1934
        %1952 = vmatprep.subr.bf16.mxu0 0
        %1953 = vmatpush2.bf16.msra.mxu0 0
        %1954 = vmatprep.subr.bf16.mxu0 0
        %1955 = vmatpush2.bf16.msra.mxu0 0
        %1956 = vmatprep.subr.bf16.mxu0 0
        %1957 = vmatpush2.bf16.msra.mxu0 0
        %1958 = vmatprep.subr.bf16.mxu0 0
        %1959 = vmatpush2.bf16.msra.mxu0 0
        %1960 = vmatprep.subr.bf16.mxu0 0
        %1961 = vmatpush2.bf16.msra.mxu0 0
        %1962 = vmatprep.subr.bf16.mxu0 0
        %1963 = vmatpush2.bf16.msra.mxu0 0
        %1964 = vmatprep.subr.bf16.mxu0 0
        %1965 = vmatpush2.bf16.msra.mxu0 0
        %1966 = vmatprep.subr.bf16.mxu0 0
        %1967 = vmatpush2.bf16.msra.mxu0 0
        %1968 = vmatprep.mubr.bf16.mxu0 0
        %1969 = vmatmul.mubr.bf16.gmra.mxu0 %v1910
        %v1970 = vpop.f32.mrf.mxu0
        %v1971 = vadd.f32 %v885, %v1970
        %v1972 = vpop.f32.mrf.mxu0
        %v1973 = vpop.f32.mrf.mxu0
        %v1974 = vadd.f32 %v885, %v1973
        %v1975 = vpop.f32.mrf.mxu0
        %1976 = vmatprep.mubr.bf16.mxu0 0
        %1977 = vmatmul.mubr.bf16.gmra.mxu0 %v1913
        %v1978 = vpop.f32.mrf.mxu0
        %v1979 = vadd.f32 %v885, %v1978
        %v1980 = vpop.f32.mrf.mxu0
        %v1981 = vpop.f32.mrf.mxu0
        %v1982 = vadd.f32 %v885, %v1981
        %v1983 = vpop.f32.mrf.mxu0
        %1984 = vmatprep.mubr.bf16.mxu0 0
        %1985 = vmatmul.mubr.bf16.gmra.mxu0 %v1916
        %v1986 = vpop.f32.mrf.mxu0
        %v1987 = vadd.f32 %v885, %v1986
        %v1988 = vpop.f32.mrf.mxu0
        %v1989 = vpop.f32.mrf.mxu0
        %v1990 = vadd.f32 %v885, %v1989
        %v1991 = vpop.f32.mrf.mxu0
        %1992 = vmatprep.mubr.bf16.mxu0 0
        %1993 = vmatmul.mubr.bf16.gmra.mxu0 %v1919
        %v1994 = vpop.f32.mrf.mxu0
        %v1995 = vadd.f32 %v885, %v1994
        %v1996 = vpop.f32.mrf.mxu0
        %v1997 = vpop.f32.mrf.mxu0
        %v1998 = vadd.f32 %v885, %v1997
        %v1999 = vpop.f32.mrf.mxu0
        %2000 = vmatprep.mubr.bf16.mxu0 0
        %2001 = vmatmul.mubr.bf16.gmra.mxu0 %v1922
        %v2002 = vpop.f32.mrf.mxu0
        %v2003 = vadd.f32 %v885, %v2002
        %v2004 = vpop.f32.mrf.mxu0
        %v2005 = vpop.f32.mrf.mxu0
        %v2006 = vadd.f32 %v885, %v2005
        %v2007 = vpop.f32.mrf.mxu0
        %2008 = vmatprep.mubr.bf16.mxu0 0
        %2009 = vmatmul.mubr.bf16.gmra.mxu0 %v1925
        %v2010 = vpop.f32.mrf.mxu0
        %v2011 = vadd.f32 %v885, %v2010
        %v2012 = vpop.f32.mrf.mxu0
        %v2013 = vpop.f32.mrf.mxu0
        %v2014 = vadd.f32 %v885, %v2013
        %v2015 = vpop.f32.mrf.mxu0
        %2016 = vmatprep.mubr.bf16.mxu0 0
        %2017 = vmatmul.mubr.bf16.gmra.mxu0 %v1928
        %v2018 = vpop.f32.mrf.mxu0
        %v2019 = vadd.f32 %v885, %v2018
        %v2020 = vpop.f32.mrf.mxu0
        %v2021 = vpop.f32.mrf.mxu0
        %v2022 = vadd.f32 %v885, %v2021
        %v2023 = vpop.f32.mrf.mxu0
        %2024 = vmatprep.mubr.bf16.mxu0 0
        %2025 = vmatmul.mubr.bf16.gmra.mxu0 %v1931
        %v2026 = vpop.f32.mrf.mxu0
        %v2027 = vadd.f32 %v885, %v2026
        %v2028 = vpop.f32.mrf.mxu0
        %v2029 = vpop.f32.mrf.mxu0
        %v2030 = vadd.f32 %v885, %v2029
        %v2031 = vpop.f32.mrf.mxu0
        %2032 = vdwg.mxu0
        %2033 = vmax.xlane.f32.xlu0 %v1971
        %v2034 = vpop.xlane.xlu0 %2033
        %2035 = vmax.xlane.f32.xlu0 %v1974
        %v2036 = vpop.xlane.xlu0 %2035
        %2037 = vmax.xlane.f32.xlu0 %v1979
        %v2038 = vpop.xlane.xlu0 %2037
        %2039 = vmax.xlane.f32.xlu0 %v1982
        %v2040 = vpop.xlane.xlu0 %2039
        %2041 = vmax.xlane.f32.xlu0 %v1987
        %v2042 = vpop.xlane.xlu0 %2041
        %2043 = vmax.xlane.f32.xlu0 %v1990
        %v2044 = vpop.xlane.xlu0 %2043
        %2045 = vmax.xlane.f32.xlu0 %v1995
        %v2046 = vpop.xlane.xlu0 %2045
        %2047 = vmax.xlane.f32.xlu0 %v1998
        %v2048 = vpop.xlane.xlu0 %2047
        %2049 = vmax.xlane.f32.xlu0 %v2003
        %v2050 = vpop.xlane.xlu0 %2049
        %2051 = vmax.xlane.f32.xlu0 %v2006
        %v2052 = vpop.xlane.xlu0 %2051
        %2053 = vmax.xlane.f32.xlu0 %v2011
        %v2054 = vpop.xlane.xlu0 %2053
        %2055 = vmax.xlane.f32.xlu0 %v2014
        %v2056 = vpop.xlane.xlu0 %2055
        %2057 = vmax.xlane.f32.xlu0 %v2019
        %v2058 = vpop.xlane.xlu0 %2057
        %2059 = vmax.xlane.f32.xlu0 %v2022
        %v2060 = vpop.xlane.xlu0 %2059
        %2061 = vmax.xlane.f32.xlu0 %v2027
        %v2062 = vpop.xlane.xlu0 %2061
        %2063 = vmax.xlane.f32.xlu0 %v2030
        %v2064 = vpop.xlane.xlu0 %2063
        %v2065 = vsub.f32 %v1971, %v2034
        %v2066 = vsub.f32 %v1974, %v2036
        %v2067 = vsub.f32 %v1979, %v2038
        %v2068 = vsub.f32 %v1982, %v2040
        %v2069 = vsub.f32 %v1987, %v2042
        %v2070 = vsub.f32 %v1990, %v2044
        %v2071 = vsub.f32 %v1995, %v2046
        %v2072 = vsub.f32 %v1998, %v2048
        %v2073 = vsub.f32 %v2003, %v2050
        %v2074 = vsub.f32 %v2006, %v2052
        %v2075 = vsub.f32 %v2011, %v2054
        %v2076 = vsub.f32 %v2014, %v2056
        %v2077 = vsub.f32 %v2019, %v2058
        %v2078 = vsub.f32 %v2022, %v2060
        %v2079 = vsub.f32 %v2027, %v2062
        %v2080 = vsub.f32 %v2030, %v2064
        %v2081 = vmul.f32 %v2065, 1.442695
        %v2082 = vpow.pop %v2081
        %v2083 = vmul.f32 %v2066, 1.442695
        %v2084 = vpow.pop %v2083
        %v2085 = vmul.f32 %v2067, 1.442695
        %v2086 = vpow.pop %v2085
        %v2087 = vmul.f32 %v2068, 1.442695
        %v2088 = vpow.pop %v2087
        %v2089 = vmul.f32 %v2069, 1.442695
        %v2090 = vpow.pop %v2089
        %v2091 = vmul.f32 %v2070, 1.442695
        %v2092 = vpow.pop %v2091
        %v2093 = vmul.f32 %v2071, 1.442695
        %v2094 = vpow.pop %v2093
        %v2095 = vmul.f32 %v2072, 1.442695
        %v2096 = vpow.pop %v2095
        %v2097 = vmul.f32 %v2073, 1.442695
        %v2098 = vpow.pop %v2097
        %v2099 = vmul.f32 %v2074, 1.442695
        %v2100 = vpow.pop %v2099
        %v2101 = vmul.f32 %v2075, 1.442695
        %v2102 = vpow.pop %v2101
        %v2103 = vmul.f32 %v2076, 1.442695
        %v2104 = vpow.pop %v2103
        %v2105 = vmul.f32 %v2077, 1.442695
        %v2106 = vpow.pop %v2105
        %v2107 = vmul.f32 %v2078, 1.442695
        %v2108 = vpow.pop %v2107
        %v2109 = vmul.f32 %v2079, 1.442695
        %v2110 = vpow.pop %v2109
        %v2111 = vmul.f32 %v2080, 1.442695
        %v2112 = vpow.pop %v2111
        %2113 = vadd.xlane.f32.xlu0 %v2082
        %v2114 = vpop.xlane.xlu0 %2113
        %2115 = vadd.xlane.f32.xlu0 %v2084
        %v2116 = vpop.xlane.xlu0 %2115
        %2117 = vadd.xlane.f32.xlu0 %v2086
        %v2118 = vpop.xlane.xlu0 %2117
        %2119 = vadd.xlane.f32.xlu0 %v2088
        %v2120 = vpop.xlane.xlu0 %2119
        %2121 = vadd.xlane.f32.xlu0 %v2090
        %v2122 = vpop.xlane.xlu0 %2121
        %2123 = vadd.xlane.f32.xlu0 %v2092
        %v2124 = vpop.xlane.xlu0 %2123
        %2125 = vadd.xlane.f32.xlu0 %v2094
        %v2126 = vpop.xlane.xlu0 %2125
        %2127 = vadd.xlane.f32.xlu0 %v2096
        %v2128 = vpop.xlane.xlu0 %2127
        %2129 = vadd.xlane.f32.xlu0 %v2098
        %v2130 = vpop.xlane.xlu0 %2129
        %2131 = vadd.xlane.f32.xlu0 %v2100
        %v2132 = vpop.xlane.xlu0 %2131
        %2133 = vadd.xlane.f32.xlu0 %v2102
        %v2134 = vpop.xlane.xlu0 %2133
        %2135 = vadd.xlane.f32.xlu0 %v2104
        %v2136 = vpop.xlane.xlu0 %2135
        %2137 = vadd.xlane.f32.xlu0 %v2106
        %v2138 = vpop.xlane.xlu0 %2137
        %2139 = vadd.xlane.f32.xlu0 %v2108
        %v2140 = vpop.xlane.xlu0 %2139
        %2141 = vadd.xlane.f32.xlu0 %v2110
        %v2142 = vpop.xlane.xlu0 %2141
        %2143 = vadd.xlane.f32.xlu0 %v2112
        %v2144 = vpop.xlane.xlu0 %2143
        %v2145 = vrcp.pop %v2114
        %v2146 = vrcp.pop %v2116
        %v2147 = vrcp.pop %v2118
        %v2148 = vrcp.pop %v2120
        %v2149 = vrcp.pop %v2122
        %v2150 = vrcp.pop %v2124
        %v2151 = vrcp.pop %v2126
        %v2152 = vrcp.pop %v2128
        %v2153 = vrcp.pop %v2130
        %v2154 = vrcp.pop %v2132
        %v2155 = vrcp.pop %v2134
        %v2156 = vrcp.pop %v2136
        %v2157 = vrcp.pop %v2138
        %v2158 = vrcp.pop %v2140
        %v2159 = vrcp.pop %v2142
        %v2160 = vrcp.pop %v2144
        %v2161 = vmul.f32 %v2082, %v2145
        %v2162 = vmul.f32 %v2084, %v2146
        %v2163 = vmul.f32 %v2086, %v2147
        %v2164 = vmul.f32 %v2088, %v2148
        %v2165 = vmul.f32 %v2090, %v2149
        %v2166 = vmul.f32 %v2092, %v2150
        %v2167 = vmul.f32 %v2094, %v2151
        %v2168 = vmul.f32 %v2096, %v2152
        %v2169 = vmul.f32 %v2098, %v2153
        %v2170 = vmul.f32 %v2100, %v2154
        %v2171 = vmul.f32 %v2102, %v2155
        %v2172 = vmul.f32 %v2104, %v2156
        %v2173 = vmul.f32 %v2106, %v2157
        %v2174 = vmul.f32 %v2108, %v2158
        %v2175 = vmul.f32 %v2110, %v2159
        %v2176 = vmul.f32 %v2112, %v2160
        %v2177 = vpack.c.bf16 %v2162, %v2161
        %v2178 = vpack.c.bf16 %v2164, %v2163
        %v2179 = vpack.c.bf16 %v2166, %v2165
        %v2180 = vpack.c.bf16 %v2168, %v2167
        %v2181 = vpack.c.bf16 %v2170, %v2169
        %v2182 = vpack.c.bf16 %v2172, %v2171
        %v2183 = vpack.c.bf16 %v2174, %v2173
        %v2184 = vpack.c.bf16 %v2176, %v2175
        %2185 = vmatprep.subr.bf16.mxu0 0
        %2186 = vmatpush1.bf16.xpose.msra.mxu0 %v2184
        %2187 = vmatprep.subr.bf16.mxu0 0
        %2188 = vmatpush1.bf16.xpose.msra.mxu0 %v2183
        %2189 = vmatprep.subr.bf16.mxu0 0
        %2190 = vmatpush1.bf16.xpose.msra.mxu0 %v2182
        %2191 = vmatprep.subr.bf16.mxu0 0
        %2192 = vmatpush1.bf16.xpose.msra.mxu0 %v2181
        %2193 = vmatprep.subr.bf16.mxu0 0
        %2194 = vmatpush1.bf16.xpose.msra.mxu0 %v2180
        %2195 = vmatprep.subr.bf16.mxu0 0
        %2196 = vmatpush1.bf16.xpose.msra.mxu0 %v2179
        %2197 = vmatprep.subr.bf16.mxu0 0
        %2198 = vmatpush1.bf16.xpose.msra.mxu0 %v2178
        %2199 = vmatprep.subr.bf16.mxu0 0
        %2200 = vmatpush1.bf16.xpose.msra.mxu0 %v2177
        %2201 = vmatprep.subr.bf16.mxu0 0
        %2202 = vmatpush2.bf16.xpose.msra.mxu0 0
        %2203 = vmatprep.subr.bf16.mxu0 0
        %2204 = vmatpush2.bf16.xpose.msra.mxu0 0
        %2205 = vmatprep.subr.bf16.mxu0 0
        %2206 = vmatpush2.bf16.xpose.msra.mxu0 0
        %2207 = vmatprep.subr.bf16.mxu0 0
        %2208 = vmatpush2.bf16.xpose.msra.mxu0 0
        %2209 = vmatprep.subr.bf16.mxu0 0
        %2210 = vmatpush2.bf16.xpose.msra.mxu0 0
        %2211 = vmatprep.subr.bf16.mxu0 0
        %2212 = vmatpush2.bf16.xpose.msra.mxu0 0
        %2213 = vmatprep.subr.bf16.mxu0 0
        %2214 = vmatpush2.bf16.xpose.msra.mxu0 0
        %2215 = vmatprep.subr.bf16.mxu0 0
        %2216 = vmatpush2.bf16.xpose.msra.mxu0 0
        %2217 = vmatprep.mubr.bf16.mxu0 0
        %2218 = vmatmul.mubr.bf16.gmra.mxu0 %v881
        %v2219 = vpop.f32.mrf.mxu0
        %v2220 = vadd.f32 0.0, %v2219
        %v2221 = vpop.f32.mrf.mxu0
        %v2222 = vpop.f32.mrf.mxu0
        %v2223 = vpop.f32.mrf.mxu0
        %2224 = vdwg.mxu0
        %2225 = vst [vmem:[#allocation4 + $0x18] sm:$0xff] %v2220
        %v2226 = vld [vmem:[#allocation4] sm:$0xff]
        %v2227 = vld [vmem:[#allocation4 + $0x8] sm:$0xff]
        %v2228 = vld [vmem:[#allocation4 + $0x10] sm:$0xff]
        %v2229 = vld [vmem:[#allocation4 + $0x18] sm:$0xff]
        %v2230 = vpack.c.bf16 %v2227, %v2226
        %v2231 = vpack.c.bf16 %v2229, %v2228
        %v2232 = vld [vmem:[#allocation13] sm:$0xf]
        %v2233 = vld [vmem:[#allocation13 + $0x4] sm:$0xf]
        %v2234 = vld [vmem:[#allocation13 + $0x8] sm:$0xf]
        %v2235 = vld [vmem:[#allocation13 + $0xc] sm:$0xf]
        %v2236 = vld [vmem:[%s10] sm:$0xff]
        %v2237 = vld [vmem:[%s10 + $0x8] sm:$0xff]
        %v2238 = vld [vmem:[%s10 + $0x10] sm:$0xff]
        %v2239 = vld [vmem:[%s10 + $0x18] sm:$0xff]
        %2241 = vset.pattern.permute.xlu0 0
        %2242 = vperm.xlu0 %2241, %v2236
        %v2243 = vpop.permute.xlu0 %2242
        %2246 = vset.pattern.permute.xlu0 0
        %2247 = vperm.xlu0 %2246, %v2237
        %v2248 = vpop.permute.xlu0 %2247
        %2251 = vset.pattern.permute.xlu0 0
        %2252 = vperm.xlu0 %2251, %v2238
        %v2253 = vpop.permute.xlu0 %2252
        %2256 = vset.pattern.permute.xlu0 0
        %2257 = vperm.xlu0 %2256, %v2239
        %v2258 = vpop.permute.xlu0 %2257
        %v2264 = vunpack.c.l.b16 %v2232
        %v2265 = vunpack.c.l.b16 %v2233
        %v2266 = vunpack.c.l.b16 %v2234
        %v2267 = vunpack.c.l.b16 %v2235
        %v2268 = vpack.c.b16 %v2265, %v2264
        %v2269 = vpack.c.b16 %v2267, %v2266
        %v2271 = vsel %vm816, %v2268, 0
        %v2274 = vsel %vm816, %v2269, 0
        %2276 = vmatprep.subr.bf16.mxu0 0
        %2277 = vmatpush1.bf16.msra.mxu0 0
        %2278 = vmatprep.subr.bf16.mxu0 0
        %2279 = vmatpush1.bf16.msra.mxu0 0
        %2280 = vmatprep.subr.bf16.mxu0 0
        %2281 = vmatpush1.bf16.msra.mxu0 0
        %2282 = vmatprep.subr.bf16.mxu0 0
        %2283 = vmatpush1.bf16.msra.mxu0 0
        %2284 = vmatprep.subr.bf16.mxu0 0
        %2285 = vmatpush1.bf16.msra.mxu0 0
        %2286 = vmatprep.subr.bf16.mxu0 0
        %2287 = vmatpush1.bf16.msra.mxu0 0
        %2288 = vmatprep.subr.bf16.mxu0 0
        %2289 = vmatpush1.bf16.msra.mxu0 %v2231
        %2290 = vmatprep.subr.bf16.mxu0 0
        %2291 = vmatpush1.bf16.msra.mxu0 %v2230
        %2292 = vmatprep.subr.bf16.mxu0 0
        %2293 = vmatpush2.bf16.msra.mxu0 0
        %2294 = vmatprep.subr.bf16.mxu0 0
        %2295 = vmatpush2.bf16.msra.mxu0 0
        %2296 = vmatprep.subr.bf16.mxu0 0
        %2297 = vmatpush2.bf16.msra.mxu0 0
        %2298 = vmatprep.subr.bf16.mxu0 0
        %2299 = vmatpush2.bf16.msra.mxu0 0
        %2300 = vmatprep.subr.bf16.mxu0 0
        %2301 = vmatpush2.bf16.msra.mxu0 0
        %2302 = vmatprep.subr.bf16.mxu0 0
        %2303 = vmatpush2.bf16.msra.mxu0 0
        %2304 = vmatprep.subr.bf16.mxu0 0
        %2305 = vmatpush2.bf16.msra.mxu0 0
        %2306 = vmatprep.subr.bf16.mxu0 0
        %2307 = vmatpush2.bf16.msra.mxu0 0
        %2308 = vmatprep.mubr.bf16.mxu0 0
        %2309 = vmatmul.mubr.bf16.gmra.mxu0 %v2271
        %v2310 = vpop.f32.mrf.mxu0
        %v2311 = vadd.f32 %v2243, %v2310
        %v2312 = vpop.f32.mrf.mxu0
        %v2313 = vpop.f32.mrf.mxu0
        %v2314 = vadd.f32 %v2248, %v2313
        %v2315 = vpop.f32.mrf.mxu0
        %2316 = vmatprep.mubr.bf16.mxu0 0
        %2317 = vmatmul.mubr.bf16.gmra.mxu0 %v2274
        %v2318 = vpop.f32.mrf.mxu0
        %v2319 = vadd.f32 %v2253, %v2318
        %v2320 = vpop.f32.mrf.mxu0
        %v2321 = vpop.f32.mrf.mxu0
        %v2322 = vadd.f32 %v2258, %v2321
        %v2323 = vpop.f32.mrf.mxu0
        %2324 = vdwg.mxu0
        %2325 = vst [vmem:[%s514] sm:$0xff] %v2311
        %2326 = vst [vmem:[%s514 + $0x8] sm:$0xff] %v2314
        %2327 = vst [vmem:[%s514 + $0x10] sm:$0xff] %v2319
        %2328 = vst [vmem:[%s514 + $0x18] sm:$0xff] %v2322
        %s2329 = sand.u32 %s300, 1
        %s2330 = scalar_lea.sflag [#allocation7], %s2329
        %s2331 = sand.u32 %s300, 1
        %s2332 = smul.addr %s2331, 32
        %s2333 = scalar_lea.vmem [#allocation14], %s2332
        // Predicated region
        $region89: #{tpu_custom_call.1} parent=63 // pred_check
          %p2334 = pneg %p310
        $region90: #{tpu_custom_call.1} parent=63 // pred_check_branch
          %2336 = sbr.rel (%p2334) target = $region92
        $region91: #{tpu_custom_call.1} parent=63 // pred_region
          %s2338 = ssub.s32 512, 512
          %2339 = vsyncadd %s2330, %s2338
          %s2340 = smul.addr %s34, 4
          %s2341 = sadd.s32 %s35, %s2340
          %s2342 = smul.addr %s2341, 128
          %s2343 = scalar_lea.hbm %s11, %s2342
          %s2344 = sshll.u32 %s2333, 4
          %s2345 = int_to_ptr.vmem [resolvable:$true] %s2344
          %2350 = dma.vmem_to_hbm [thread:$0]  %s2345, 512, %s2343, %s2330, 128, 128, 8
        $region92: #{tpu_custom_call.1} parent=63 // pred_fallthru
          _
      $region64: #{tpu_custom_call.1} parent=5 // pred_fallthru
        _
      %p2351 = scmp.le.s32.totalorder 2, %s25
      // Predicated region
      $region93: #{tpu_custom_call.1} parent=5 // pred_check
        %p2352 = pneg %p2351
      $region94: #{tpu_custom_call.1} parent=5 // pred_check_branch
        %2354 = sbr.rel (%p2352) target = $region96
      $region95: #{tpu_custom_call.1} parent=5 // pred_region
        %s2355 = ssub.s32 %s25, 2
        // Predicated region
        $region97: #{tpu_custom_call.1} parent=95 // pred_check
          %p2356 = pneg %p316
        $region98: #{tpu_custom_call.1} parent=95 // pred_check_branch
          %2358 = sbr.rel (%p2356) target = $region100
        $region99: #{tpu_custom_call.1} parent=95 // pred_region
          %s2359 = sand.u32 %s301, 1
          %s2360 = scalar_lea.sflag [#allocation7], %s2359
          %s2361 = sand.u32 %s301, 1
          %s2362 = smul.addr %s2361, 32
          %s2363 = scalar_lea.vmem [#allocation14], %s2362
          %2364 = dma.done %s2360, 512
        $region100: #{tpu_custom_call.1} parent=95 // pred_fallthru
          _
      $region96: #{tpu_custom_call.1} parent=5 // pred_fallthru
        _
    $region6: #{tpu_custom_call.1} parent=1 // loop_footer
      %s29 = sadd.s32 1, %s25
    $region7: #{tpu_custom_call.1} parent=1 // loop_footer_branch
      %24 = sbr.rel target = $region3
    $region8: #{tpu_custom_call.1} parent=1 // loop_exit
      _
    %2365 = vsyncpa [#allocation6], 1
    %s2366 = scalar_lea.sflag [#allocation6], 1
    %2367 = vsyncpa %s2366, 1
    %2368 = vsyncpa [#allocation9], 1
    %2369 = vsyncpa [#allocation12], 1
    %2370 = vsyncpa [#allocation7], 1
    %s2371 = scalar_lea.sflag [#allocation7], 1
    %2372 = vsyncpa %s2371, 1

</llo_original>
